<compile_context>
chip_gen: v6e
topology: v6e:2x2x1
jax: 0.10.0
libtpu: 0.0.40
codegen_flags: <defaults>
</compile_context>

<pallas_src>
import jax
import jax.numpy as jnp
from jax import lax
from jax.experimental import pallas as pl
from jax.experimental.pallas import tpu as pltpu


# ---------------------------------------------------------------------------
# Fused Pallas kernel: n_layers LSTM (time loop in-kernel) + Linear epilogue
# ---------------------------------------------------------------------------
def _make_fused_kernel(n_layers, T, B, F, H):
    """Builds the fused kernel for static (n_layers, T, B, F, H)."""
    G = 4 * H  # gate container width (one f32 vreg row when H == 32)

    def kernel(*refs):
        n_in = 4 + 2 * (n_layers - 1) + 2
        x_ref = refs[0]                             # (T*B, F)  time-major, row t*B+b
        w_ih0_ref = refs[1]                         # (F, G)    layer-0 input weights
        b0_ref = refs[2]                            # (1, G)    layer-0 bias (b_ih+b_hh)
        w_hh0_ref = refs[3]                         # (G, G)    rows [0,H) valid, rest 0
        stk_refs = refs[4:4 + 2 * (n_layers - 1)]   # per layer>=1: stacked W (G,G), bias (1,G)
        fc_w_ref = refs[n_in - 2]                   # (1, G)    zero beyond lane H
        fc_b_ref = refs[n_in - 1]                   # (1,)      SMEM scalar
        out_ref = refs[n_in]                        # (B, 1)    VMEM
        xproj_ref = refs[n_in + 1]                  # (T*B, G)  VMEM scratch

        # ---- loop-invariant hoists (masks, weights, broadcast biases) ----
        lane = lax.broadcasted_iota(jnp.int32, (B, G), 1)
        g_mask = (lane >= 2 * H) & (lane < 3 * H)   # tanh lanes (g gate)
        lo_mask = lane < H                          # lanes holding live state

        w_hh0 = w_hh0_ref[...]
        upper = []
        for l in range(1, n_layers):
            w_stk = stk_refs[2 * (l - 1)][...]
            bias = jnp.broadcast_to(stk_refs[2 * (l - 1) + 1][...], (B, G))
            upper.append((w_stk, bias))

        # ---- opt 1: hoisted layer-0 input projection, bias folded --------
        xproj_ref[...] = (
            jnp.dot(x_ref[...], w_ih0_ref[...], preferred_element_type=jnp.float32)
            + b0_ref[...])

        # ---- whole-vreg gate math (opt 3) ---------------------------------
        # PyTorch gate layout in lanes: [i | f | g | o], each H wide.
        def gate_math(gates, c_prev):
            act = jnp.where(g_mask, jnp.tanh(gates), jax.nn.sigmoid(gates))
            f_al = pltpu.roll(act, shift=3 * H, axis=1)   # f -> lanes [0, H)
            g_al = pltpu.roll(act, shift=2 * H, axis=1)   # g -> lanes [0, H)
            o_al = pltpu.roll(act, shift=H, axis=1)       # o -> lanes [0, H)
            c_new = f_al * c_prev + act * g_al            # i is act at lanes [0, H)
            h_new = o_al * jnp.tanh(c_new)
            return h_new, c_new                           # valid in lanes [0, H)

        zero = jnp.zeros((B, G), jnp.float32)
        h = [zero] * n_layers
        c = [zero] * n_layers

        # Fully unrolled time recurrence (T is small and static).
        # TODO(synk): switch to lax.fori_loop with bounded unroll if T grows.
        for t in range(T):
            # Layer 0: single dependent matmul per step (input proj precomputed).
            gates0 = xproj_ref[t * B:(t + 1) * B, :] + jnp.dot(
                h[0], w_hh0, preferred_element_type=jnp.float32)
            h[0], c[0] = gate_math(gates0, c[0])
            # Layers >= 1: one fused matmul on the packed [h_below | h_prev] operand.
            for l in range(1, n_layers):
                w_stk, bias = upper[l - 1]
                packed = jnp.where(lo_mask, h[l - 1],
                                   pltpu.roll(h[l], shift=H, axis=1))
                gates_l = jnp.dot(packed, w_stk,
                                  preferred_element_type=jnp.float32) + bias
                h[l], c[l] = gate_math(gates_l, c[l])

        # FC epilogue: VPU multiply + lane reduction (fc_w zero-padded past H).
        h_last = h[n_layers - 1]                          # (B, G), valid lanes [0, H)
        out = jnp.sum(h_last * fc_w_ref[...], axis=-1, keepdims=True) + fc_b_ref[0]
        out_ref[...] = out.astype(out_ref.dtype)

    return kernel


# ---------------------------------------------------------------------------
# Wrapper: param packing (once) + single pallas_call
# ---------------------------------------------------------------------------
def _pack_params(params):
    """Pre-stack / zero-pad weights for the kernel (cheap, do once)."""
    n_layers = len(params["lstm"])
    H = params["lstm"][0]["w_hh_t"].shape[0]
    G = 4 * H
    l0 = params["lstm"][0]
    packed = {
        "w_ih0": l0["w_ih_t"],                                              # (F, G)
        "b0": l0["bias"],                                                   # (1, G)
        "w_hh0_pad": jnp.zeros((G, G), jnp.float32).at[:H, :].set(l0["w_hh_t"]),
        "upper": [],
        "fc_w_pad": jnp.zeros((1, G), jnp.float32).at[:, :H].set(params["fc_w"]),
        "fc_b": params["fc_b"],
    }
    for l in range(1, n_layers):
        lay = params["lstm"][l]
        w_stk = (jnp.zeros((G, G), jnp.float32)
                 .at[:H, :].set(lay["w_ih_t"])
                 .at[H:2 * H, :].set(lay["w_hh_t"]))
        packed["upper"].append((w_stk, lay["bias"]))
    return packed, n_layers, H


def regresseur_lstm_forward(params, x):
    """x: (batch, seq_len, features) -> (batch, 1).  One fused pallas_call."""
    x = x.astype(jnp.float32)
    B, T, F = x.shape
    packed, n_layers, H = _pack_params(params)
    G = 4 * H

    x2d = jnp.transpose(x, (1, 0, 2)).reshape(T * B, F)    # time-major rows t*B+b

    operands = [x2d, packed["w_ih0"], packed["b0"], packed["w_hh0_pad"]]
    for w_stk, bias in packed["upper"]:
        operands += [w_stk, bias]
    operands += [packed["fc_w_pad"], packed["fc_b"]]

    vmem = pl.BlockSpec(memory_space=pltpu.MemorySpace.VMEM)
    in_specs = [vmem] * (len(operands) - 1) + [
        pl.BlockSpec(memory_space=pltpu.MemorySpace.SMEM)]  # scalar fc bias

    return pl.pallas_call(
        _make_fused_kernel(n_layers, T, B, F, H),
        out_shape=jax.ShapeDtypeStruct((B, 1), jnp.float32),
        in_specs=in_specs,
        out_specs=pl.BlockSpec(memory_space=pltpu.MemorySpace.VMEM),
        scratch_shapes=[pltpu.VMEM((T * B, G), jnp.float32)],   # hoisted x projection
    )(*operands)


# ---------------------------------------------------------------------------
# Parameter setup mirroring nn.LSTM / nn.Linear shapes
# ---------------------------------------------------------------------------
def init_params(key, in_size, hid_size, n_layers):
    """PyTorch uses U(-1/sqrt(hid), 1/sqrt(hid)) for all LSTM & Linear params."""
    bound = 1.0 / float(hid_size) ** 0.5
    params = {"lstm": []}
    for layer in range(n_layers):
        f_in = in_size if layer == 0 else hid_size
        key, k1, k2, k3, k4 = jax.random.split(key, 5)
        w_ih = jax.random.uniform(k1, (4 * hid_size, f_in), jnp.float32, -bound, bound)
        w_hh = jax.random.uniform(k2, (4 * hid_size, hid_size), jnp.float32, -bound, bound)
        b_ih = jax.random.uniform(k3, (4 * hid_size,), jnp.float32, -bound, bound)
        b_hh = jax.random.uniform(k4, (4 * hid_size,), jnp.float32, -bound, bound)
        params["lstm"].append({
            "w_ih_t": w_ih.T,                              # (F_in, 4H)
            "w_hh_t": w_hh.T,                              # (H, 4H)
            "bias": (b_ih + b_hh).reshape(1, 4 * hid_size),
        })
    key, k5, k6 = jax.random.split(key, 3)
    params["fc_w"] = jax.random.uniform(k5, (1, hid_size), jnp.float32, -bound, bound)
    params["fc_b"] = jax.random.uniform(k6, (1,), jnp.float32, -bound, bound)
    return params


# ---------------------------------------------------------------------------
# Pure-JAX reference (for correctness check)
# ---------------------------------------------------------------------------
def regresseur_lstm_reference(params, x):
    B = x.shape[0]
    h_seq = jnp.transpose(x, (1, 0, 2)).astype(jnp.float32)
    for layer in params["lstm"]:
        H = layer["w_hh_t"].shape[0]

        def step(carry, x_t, layer=layer, H=H):
            h, c = carry
            gates = x_t @ layer["w_ih_t"] + h @ layer["w_hh_t"] + layer["bias"]
            i = jax.nn.sigmoid(gates[:, 0 * H:1 * H])
            f = jax.nn.sigmoid(gates[:, 1 * H:2 * H])
            g = jnp.tanh(gates[:, 2 * H:3 * H])
            o = jax.nn.sigmoid(gates[:, 3 * H:4 * H])
            c = f * c + i * g
            h = o * jnp.tanh(c)
            return (h, c), h

        init = (jnp.zeros((B, H), jnp.float32), jnp.zeros((B, H), jnp.float32))
        _, h_seq = jax.lax.scan(step, init, h_seq)
    return h_seq[-1] @ params["fc_w"].T + params["fc_b"]


# ---------------------------------------------------------------------------
if __name__ == "__main__":
    in_size, hid_size, n_layers, dropout = 6, 32, 2, 0.2   # dropout: identity at inference
    batch, seq_len = 2, 8

    key = jax.random.PRNGKey(0)
    key, kx, kp = jax.random.split(key, 3)
    x = jax.random.normal(kx, (batch, seq_len, in_size), jnp.float32)
    params = init_params(kp, in_size, hid_size, n_layers)

    out = jax.block_until_ready(regresseur_lstm_forward(params, x))
    ref = jax.block_until_ready(regresseur_lstm_reference(params, x))

    assert out.shape == (batch, 1), out.shape
    assert jnp.allclose(out, ref, atol=1e-5, rtol=1e-5), (out, ref)

    print("KERNEL_OK")
</pallas_src>

<mosaic_0001>
module attributes {stable_mosaic.version = 11 : i64} {
  func.func @kernel(%arg0: memref<16x6xf32, #tpu.memory_space<vmem>>, %arg1: memref<6x128xf32, #tpu.memory_space<vmem>>, %arg2: memref<1x128xf32, #tpu.memory_space<vmem>>, %arg3: memref<128x128xf32, #tpu.memory_space<vmem>>, %arg4: memref<128x128xf32, #tpu.memory_space<vmem>>, %arg5: memref<1x128xf32, #tpu.memory_space<vmem>>, %arg6: memref<1x128xf32, #tpu.memory_space<vmem>>, %arg7: memref<1xf32, #tpu.memory_space<smem>>, %arg8: memref<2x1xf32, #tpu.memory_space<vmem>>, %arg9: memref<16x128xf32, #tpu.memory_space<vmem>>) attributes {dimension_semantics = [], scalar_prefetch = 0 : i64, scratch_operands = 1 : i64, tpu.core_type = #tpu.core_type<tc>} {
    %0 = tpu.iota {dimensions = array<i32: 1>} : vector<2x128xi32>
    %c64_i32 = arith.constant 64 : i32
    %1 = vector.broadcast %c64_i32 : i32 to vector<2x128xi32>
    %2 = arith.cmpi sge, %0, %1 : vector<2x128xi32>
    %c96_i32 = arith.constant 96 : i32
    %3 = vector.broadcast %c96_i32 : i32 to vector<2x128xi32>
    %4 = arith.cmpi slt, %0, %3 : vector<2x128xi32>
    %5 = arith.andi %2, %4 : vector<2x128xi1>
    %c32_i32 = arith.constant 32 : i32
    %6 = vector.broadcast %c32_i32 : i32 to vector<2x128xi32>
    %7 = arith.cmpi slt, %0, %6 : vector<2x128xi32>
    %c0 = arith.constant 0 : index
    %c0_0 = arith.constant 0 : index
    %8 = vector.load %arg3[%c0, %c0_0] : memref<128x128xf32, #tpu.memory_space<vmem>>, vector<128x128xf32>
    %c0_1 = arith.constant 0 : index
    %c0_2 = arith.constant 0 : index
    %9 = vector.load %arg4[%c0_1, %c0_2] : memref<128x128xf32, #tpu.memory_space<vmem>>, vector<128x128xf32>
    %c0_3 = arith.constant 0 : index
    %c0_4 = arith.constant 0 : index
    %10 = vector.load %arg5[%c0_3, %c0_4] : memref<1x128xf32, #tpu.memory_space<vmem>>, vector<1x128xf32>
    %11 = vector.shape_cast %10 : vector<1x128xf32> to vector<1x128xf32>
    %12 = vector.broadcast %11 : vector<1x128xf32> to vector<2x128xf32>
    %c0_5 = arith.constant 0 : index
    %c0_6 = arith.constant 0 : index
    %13 = vector.load %arg0[%c0_5, %c0_6] : memref<16x6xf32, #tpu.memory_space<vmem>>, vector<16x6xf32>
    %c0_7 = arith.constant 0 : index
    %c0_8 = arith.constant 0 : index
    %14 = vector.load %arg1[%c0_7, %c0_8] : memref<6x128xf32, #tpu.memory_space<vmem>>, vector<6x128xf32>
    %cst = arith.constant dense<0.000000e+00> : vector<16x128xf32>
    %15 = tpu.matmul %13, %14, %cst {dimension_numbers = #tpu.dot_dimension_numbers<[1], [0], [0], [1], [0, 0, 1, 1], [], []>} : vector<16x6xf32>, vector<6x128xf32>, vector<16x128xf32> -> vector<16x128xf32>
    %c0_9 = arith.constant 0 : index
    %c0_10 = arith.constant 0 : index
    %16 = vector.load %arg2[%c0_9, %c0_10] : memref<1x128xf32, #tpu.memory_space<vmem>>, vector<1x128xf32>
    %17 = vector.broadcast %16 : vector<1x128xf32> to vector<16x128xf32>
    %18 = arith.addf %15, %17 : vector<16x128xf32>
    %c0_11 = arith.constant 0 : index
    %c0_12 = arith.constant 0 : index
    %19 = vector.load %arg9[%c0_11, %c0_12] : memref<16x128xf32, #tpu.memory_space<vmem>>, vector<16x128xf32>
    tpu.vector_store %arg9[%c0_11, %c0_12], %18 {strides = array<i32>} : memref<16x128xf32, #tpu.memory_space<vmem>>, vector<16x128xf32>,
    %cst_13 = arith.constant 0.000000e+00 : f32
    %20 = vector.broadcast %cst_13 : f32 to vector<2x128xf32>
    %c0_14 = arith.constant 0 : index
    %c0_15 = arith.constant 0 : index
    %21 = vector.load %arg9[%c0_14, %c0_15] : memref<16x128xf32, #tpu.memory_space<vmem>>, vector<2x128xf32>
    %cst_16 = arith.constant dense<0.000000e+00> : vector<2x128xf32>
    %22 = tpu.matmul %20, %8, %cst_16 {dimension_numbers = #tpu.dot_dimension_numbers<[1], [0], [0], [1], [0, 0, 1, 1], [], []>} : vector<2x128xf32>, vector<128x128xf32>, vector<2x128xf32> -> vector<2x128xf32>
    %23 = arith.addf %21, %22 : vector<2x128xf32>
    %24 = math.tanh %23 : vector<2x128xf32>
    %25 = arith.negf %23 : vector<2x128xf32>
    %26 = math.exp %25 : vector<2x128xf32>
    %cst_17 = arith.constant 1.000000e+00 : f32
    %27 = vector.broadcast %cst_17 : f32 to vector<2x128xf32>
    %28 = arith.addf %27, %26 : vector<2x128xf32>
    %29 = arith.divf %27, %28 : vector<2x128xf32>
    %30 = arith.select %5, %24, %29 : vector<2x128xi1>, vector<2x128xf32>
    %c96_i32_18 = arith.constant 96 : i32
    %31 = tpu.dynamic_rotate %30 by %c96_i32_18 dim 1 : vector<2x128xf32>, i32 -> vector<2x128xf32>
    %c64_i32_19 = arith.constant 64 : i32
    %32 = tpu.dynamic_rotate %30 by %c64_i32_19 dim 1 : vector<2x128xf32>, i32 -> vector<2x128xf32>
    %c32_i32_20 = arith.constant 32 : i32
    %33 = tpu.dynamic_rotate %30 by %c32_i32_20 dim 1 : vector<2x128xf32>, i32 -> vector<2x128xf32>
    %34 = arith.mulf %31, %20 : vector<2x128xf32>
    %35 = arith.mulf %30, %32 : vector<2x128xf32>
    %36 = arith.addf %34, %35 : vector<2x128xf32>
    %37 = math.tanh %36 : vector<2x128xf32>
    %38 = arith.mulf %33, %37 : vector<2x128xf32>
    %c32_i32_21 = arith.constant 32 : i32
    %39 = tpu.dynamic_rotate %20 by %c32_i32_21 dim 1 : vector<2x128xf32>, i32 -> vector<2x128xf32>
    %40 = arith.select %7, %38, %39 : vector<2x128xi1>, vector<2x128xf32>
    %cst_22 = arith.constant dense<0.000000e+00> : vector<2x128xf32>
    %41 = tpu.matmul %40, %9, %cst_22 {dimension_numbers = #tpu.dot_dimension_numbers<[1], [0], [0], [1], [0, 0, 1, 1], [], []>} : vector<2x128xf32>, vector<128x128xf32>, vector<2x128xf32> -> vector<2x128xf32>
    %42 = arith.addf %41, %12 : vector<2x128xf32>
    %43 = math.tanh %42 : vector<2x128xf32>
    %44 = arith.negf %42 : vector<2x128xf32>
    %45 = math.exp %44 : vector<2x128xf32>
    %cst_23 = arith.constant 1.000000e+00 : f32
    %46 = vector.broadcast %cst_23 : f32 to vector<2x128xf32>
    %47 = arith.addf %46, %45 : vector<2x128xf32>
    %48 = arith.divf %46, %47 : vector<2x128xf32>
    %49 = arith.select %5, %43, %48 : vector<2x128xi1>, vector<2x128xf32>
    %c96_i32_24 = arith.constant 96 : i32
    %50 = tpu.dynamic_rotate %49 by %c96_i32_24 dim 1 : vector<2x128xf32>, i32 -> vector<2x128xf32>
    %c64_i32_25 = arith.constant 64 : i32
    %51 = tpu.dynamic_rotate %49 by %c64_i32_25 dim 1 : vector<2x128xf32>, i32 -> vector<2x128xf32>
    %c32_i32_26 = arith.constant 32 : i32
    %52 = tpu.dynamic_rotate %49 by %c32_i32_26 dim 1 : vector<2x128xf32>, i32 -> vector<2x128xf32>
    %53 = arith.mulf %50, %20 : vector<2x128xf32>
    %54 = arith.mulf %49, %51 : vector<2x128xf32>
    %55 = arith.addf %53, %54 : vector<2x128xf32>
    %56 = math.tanh %55 : vector<2x128xf32>
    %57 = arith.mulf %52, %56 : vector<2x128xf32>
    %c2 = arith.constant 2 : index
    %c0_27 = arith.constant 0 : index
    %58 = vector.load %arg9[%c2, %c0_27] : memref<16x128xf32, #tpu.memory_space<vmem>>, vector<2x128xf32>
    %cst_28 = arith.constant dense<0.000000e+00> : vector<2x128xf32>
    %59 = tpu.matmul %38, %8, %cst_28 {dimension_numbers = #tpu.dot_dimension_numbers<[1], [0], [0], [1], [0, 0, 1, 1], [], []>} : vector<2x128xf32>, vector<128x128xf32>, vector<2x128xf32> -> vector<2x128xf32>
    %60 = arith.addf %58, %59 : vector<2x128xf32>
    %61 = math.tanh %60 : vector<2x128xf32>
    %62 = arith.negf %60 : vector<2x128xf32>
    %63 = math.exp %62 : vector<2x128xf32>
    %cst_29 = arith.constant 1.000000e+00 : f32
    %64 = vector.broadcast %cst_29 : f32 to vector<2x128xf32>
    %65 = arith.addf %64, %63 : vector<2x128xf32>
    %66 = arith.divf %64, %65 : vector<2x128xf32>
    %67 = arith.select %5, %61, %66 : vector<2x128xi1>, vector<2x128xf32>
    %c96_i32_30 = arith.constant 96 : i32
    %68 = tpu.dynamic_rotate %67 by %c96_i32_30 dim 1 : vector<2x128xf32>, i32 -> vector<2x128xf32>
    %c64_i32_31 = arith.constant 64 : i32
    %69 = tpu.dynamic_rotate %67 by %c64_i32_31 dim 1 : vector<2x128xf32>, i32 -> vector<2x128xf32>
    %c32_i32_32 = arith.constant 32 : i32
    %70 = tpu.dynamic_rotate %67 by %c32_i32_32 dim 1 : vector<2x128xf32>, i32 -> vector<2x128xf32>
    %71 = arith.mulf %68, %36 : vector<2x128xf32>
    %72 = arith.mulf %67, %69 : vector<2x128xf32>
    %73 = arith.addf %71, %72 : vector<2x128xf32>
    %74 = math.tanh %73 : vector<2x128xf32>
    %75 = arith.mulf %70, %74 : vector<2x128xf32>
    %c32_i32_33 = arith.constant 32 : i32
    %76 = tpu.dynamic_rotate %57 by %c32_i32_33 dim 1 : vector<2x128xf32>, i32 -> vector<2x128xf32>
    %77 = arith.select %7, %75, %76 : vector<2x128xi1>, vector<2x128xf32>
    %cst_34 = arith.constant dense<0.000000e+00> : vector<2x128xf32>
    %78 = tpu.matmul %77, %9, %cst_34 {dimension_numbers = #tpu.dot_dimension_numbers<[1], [0], [0], [1], [0, 0, 1, 1], [], []>} : vector<2x128xf32>, vector<128x128xf32>, vector<2x128xf32> -> vector<2x128xf32>
    %79 = arith.addf %78, %12 : vector<2x128xf32>
    %80 = math.tanh %79 : vector<2x128xf32>
    %81 = arith.negf %79 : vector<2x128xf32>
    %82 = math.exp %81 : vector<2x128xf32>
    %cst_35 = arith.constant 1.000000e+00 : f32
    %83 = vector.broadcast %cst_35 : f32 to vector<2x128xf32>
    %84 = arith.addf %83, %82 : vector<2x128xf32>
    %85 = arith.divf %83, %84 : vector<2x128xf32>
    %86 = arith.select %5, %80, %85 : vector<2x128xi1>, vector<2x128xf32>
    %c96_i32_36 = arith.constant 96 : i32
    %87 = tpu.dynamic_rotate %86 by %c96_i32_36 dim 1 : vector<2x128xf32>, i32 -> vector<2x128xf32>
    %c64_i32_37 = arith.constant 64 : i32
    %88 = tpu.dynamic_rotate %86 by %c64_i32_37 dim 1 : vector<2x128xf32>, i32 -> vector<2x128xf32>
    %c32_i32_38 = arith.constant 32 : i32
    %89 = tpu.dynamic_rotate %86 by %c32_i32_38 dim 1 : vector<2x128xf32>, i32 -> vector<2x128xf32>
    %90 = arith.mulf %87, %55 : vector<2x128xf32>
    %91 = arith.mulf %86, %88 : vector<2x128xf32>
    %92 = arith.addf %90, %91 : vector<2x128xf32>
    %93 = math.tanh %92 : vector<2x128xf32>
    %94 = arith.mulf %89, %93 : vector<2x128xf32>
    %c4 = arith.constant 4 : index
    %c0_39 = arith.constant 0 : index
    %95 = vector.load %arg9[%c4, %c0_39] : memref<16x128xf32, #tpu.memory_space<vmem>>, vector<2x128xf32>
    %cst_40 = arith.constant dense<0.000000e+00> : vector<2x128xf32>
    %96 = tpu.matmul %75, %8, %cst_40 {dimension_numbers = #tpu.dot_dimension_numbers<[1], [0], [0], [1], [0, 0, 1, 1], [], []>} : vector<2x128xf32>, vector<128x128xf32>, vector<2x128xf32> -> vector<2x128xf32>
    %97 = arith.addf %95, %96 : vector<2x128xf32>
    %98 = math.tanh %97 : vector<2x128xf32>
    %99 = arith.negf %97 : vector<2x128xf32>
    %100 = math.exp %99 : vector<2x128xf32>
    %cst_41 = arith.constant 1.000000e+00 : f32
    %101 = vector.broadcast %cst_41 : f32 to vector<2x128xf32>
    %102 = arith.addf %101, %100 : vector<2x128xf32>
    %103 = arith.divf %101, %102 : vector<2x128xf32>
    %104 = arith.select %5, %98, %103 : vector<2x128xi1>, vector<2x128xf32>
    %c96_i32_42 = arith.constant 96 : i32
    %105 = tpu.dynamic_rotate %104 by %c96_i32_42 dim 1 : vector<2x128xf32>, i32 -> vector<2x128xf32>
    %c64_i32_43 = arith.constant 64 : i32
    %106 = tpu.dynamic_rotate %104 by %c64_i32_43 dim 1 : vector<2x128xf32>, i32 -> vector<2x128xf32>
    %c32_i32_44 = arith.constant 32 : i32
    %107 = tpu.dynamic_rotate %104 by %c32_i32_44 dim 1 : vector<2x128xf32>, i32 -> vector<2x128xf32>
    %108 = arith.mulf %105, %73 : vector<2x128xf32>
    %109 = arith.mulf %104, %106 : vector<2x128xf32>
    %110 = arith.addf %108, %109 : vector<2x128xf32>
    %111 = math.tanh %110 : vector<2x128xf32>
    %112 = arith.mulf %107, %111 : vector<2x128xf32>
    %c32_i32_45 = arith.constant 32 : i32
    %113 = tpu.dynamic_rotate %94 by %c32_i32_45 dim 1 : vector<2x128xf32>, i32 -> vector<2x128xf32>
    %114 = arith.select %7, %112, %113 : vector<2x128xi1>, vector<2x128xf32>
    %cst_46 = arith.constant dense<0.000000e+00> : vector<2x128xf32>
    %115 = tpu.matmul %114, %9, %cst_46 {dimension_numbers = #tpu.dot_dimension_numbers<[1], [0], [0], [1], [0, 0, 1, 1], [], []>} : vector<2x128xf32>, vector<128x128xf32>, vector<2x128xf32> -> vector<2x128xf32>
    %116 = arith.addf %115, %12 : vector<2x128xf32>
    %117 = math.tanh %116 : vector<2x128xf32>
    %118 = arith.negf %116 : vector<2x128xf32>
    %119 = math.exp %118 : vector<2x128xf32>
    %cst_47 = arith.constant 1.000000e+00 : f32
    %120 = vector.broadcast %cst_47 : f32 to vector<2x128xf32>
    %121 = arith.addf %120, %119 : vector<2x128xf32>
    %122 = arith.divf %120, %121 : vector<2x128xf32>
    %123 = arith.select %5, %117, %122 : vector<2x128xi1>, vector<2x128xf32>
    %c96_i32_48 = arith.constant 96 : i32
    %124 = tpu.dynamic_rotate %123 by %c96_i32_48 dim 1 : vector<2x128xf32>, i32 -> vector<2x128xf32>
    %c64_i32_49 = arith.constant 64 : i32
    %125 = tpu.dynamic_rotate %123 by %c64_i32_49 dim 1 : vector<2x128xf32>, i32 -> vector<2x128xf32>
    %c32_i32_50 = arith.constant 32 : i32
    %126 = tpu.dynamic_rotate %123 by %c32_i32_50 dim 1 : vector<2x128xf32>, i32 -> vector<2x128xf32>
    %127 = arith.mulf %124, %92 : vector<2x128xf32>
    %128 = arith.mulf %123, %125 : vector<2x128xf32>
    %129 = arith.addf %127, %128 : vector<2x128xf32>
    %130 = math.tanh %129 : vector<2x128xf32>
    %131 = arith.mulf %126, %130 : vector<2x128xf32>
    %c6 = arith.constant 6 : index
    %c0_51 = arith.constant 0 : index
    %132 = vector.load %arg9[%c6, %c0_51] : memref<16x128xf32, #tpu.memory_space<vmem>>, vector<2x128xf32>
    %cst_52 = arith.constant dense<0.000000e+00> : vector<2x128xf32>
    %133 = tpu.matmul %112, %8, %cst_52 {dimension_numbers = #tpu.dot_dimension_numbers<[1], [0], [0], [1], [0, 0, 1, 1], [], []>} : vector<2x128xf32>, vector<128x128xf32>, vector<2x128xf32> -> vector<2x128xf32>
    %134 = arith.addf %132, %133 : vector<2x128xf32>
    %135 = math.tanh %134 : vector<2x128xf32>
    %136 = arith.negf %134 : vector<2x128xf32>
    %137 = math.exp %136 : vector<2x128xf32>
    %cst_53 = arith.constant 1.000000e+00 : f32
    %138 = vector.broadcast %cst_53 : f32 to vector<2x128xf32>
    %139 = arith.addf %138, %137 : vector<2x128xf32>
    %140 = arith.divf %138, %139 : vector<2x128xf32>
    %141 = arith.select %5, %135, %140 : vector<2x128xi1>, vector<2x128xf32>
    %c96_i32_54 = arith.constant 96 : i32
    %142 = tpu.dynamic_rotate %141 by %c96_i32_54 dim 1 : vector<2x128xf32>, i32 -> vector<2x128xf32>
    %c64_i32_55 = arith.constant 64 : i32
    %143 = tpu.dynamic_rotate %141 by %c64_i32_55 dim 1 : vector<2x128xf32>, i32 -> vector<2x128xf32>
    %c32_i32_56 = arith.constant 32 : i32
    %144 = tpu.dynamic_rotate %141 by %c32_i32_56 dim 1 : vector<2x128xf32>, i32 -> vector<2x128xf32>
    %145 = arith.mulf %142, %110 : vector<2x128xf32>
    %146 = arith.mulf %141, %143 : vector<2x128xf32>
    %147 = arith.addf %145, %146 : vector<2x128xf32>
    %148 = math.tanh %147 : vector<2x128xf32>
    %149 = arith.mulf %144, %148 : vector<2x128xf32>
    %c32_i32_57 = arith.constant 32 : i32
    %150 = tpu.dynamic_rotate %131 by %c32_i32_57 dim 1 : vector<2x128xf32>, i32 -> vector<2x128xf32>
    %151 = arith.select %7, %149, %150 : vector<2x128xi1>, vector<2x128xf32>
    %cst_58 = arith.constant dense<0.000000e+00> : vector<2x128xf32>
    %152 = tpu.matmul %151, %9, %cst_58 {dimension_numbers = #tpu.dot_dimension_numbers<[1], [0], [0], [1], [0, 0, 1, 1], [], []>} : vector<2x128xf32>, vector<128x128xf32>, vector<2x128xf32> -> vector<2x128xf32>
    %153 = arith.addf %152, %12 : vector<2x128xf32>
    %154 = math.tanh %153 : vector<2x128xf32>
    %155 = arith.negf %153 : vector<2x128xf32>
    %156 = math.exp %155 : vector<2x128xf32>
    %cst_59 = arith.constant 1.000000e+00 : f32
    %157 = vector.broadcast %cst_59 : f32 to vector<2x128xf32>
    %158 = arith.addf %157, %156 : vector<2x128xf32>
    %159 = arith.divf %157, %158 : vector<2x128xf32>
    %160 = arith.select %5, %154, %159 : vector<2x128xi1>, vector<2x128xf32>
    %c96_i32_60 = arith.constant 96 : i32
    %161 = tpu.dynamic_rotate %160 by %c96_i32_60 dim 1 : vector<2x128xf32>, i32 -> vector<2x128xf32>
    %c64_i32_61 = arith.constant 64 : i32
    %162 = tpu.dynamic_rotate %160 by %c64_i32_61 dim 1 : vector<2x128xf32>, i32 -> vector<2x128xf32>
    %c32_i32_62 = arith.constant 32 : i32
    %163 = tpu.dynamic_rotate %160 by %c32_i32_62 dim 1 : vector<2x128xf32>, i32 -> vector<2x128xf32>
    %164 = arith.mulf %161, %129 : vector<2x128xf32>
    %165 = arith.mulf %160, %162 : vector<2x128xf32>
    %166 = arith.addf %164, %165 : vector<2x128xf32>
    %167 = math.tanh %166 : vector<2x128xf32>
    %168 = arith.mulf %163, %167 : vector<2x128xf32>
    %c8 = arith.constant 8 : index
    %c0_63 = arith.constant 0 : index
    %169 = vector.load %arg9[%c8, %c0_63] : memref<16x128xf32, #tpu.memory_space<vmem>>, vector<2x128xf32>
    %cst_64 = arith.constant dense<0.000000e+00> : vector<2x128xf32>
    %170 = tpu.matmul %149, %8, %cst_64 {dimension_numbers = #tpu.dot_dimension_numbers<[1], [0], [0], [1], [0, 0, 1, 1], [], []>} : vector<2x128xf32>, vector<128x128xf32>, vector<2x128xf32> -> vector<2x128xf32>
    %171 = arith.addf %169, %170 : vector<2x128xf32>
    %172 = math.tanh %171 : vector<2x128xf32>
    %173 = arith.negf %171 : vector<2x128xf32>
    %174 = math.exp %173 : vector<2x128xf32>
    %cst_65 = arith.constant 1.000000e+00 : f32
    %175 = vector.broadcast %cst_65 : f32 to vector<2x128xf32>
    %176 = arith.addf %175, %174 : vector<2x128xf32>
    %177 = arith.divf %175, %176 : vector<2x128xf32>
    %178 = arith.select %5, %172, %177 : vector<2x128xi1>, vector<2x128xf32>
    %c96_i32_66 = arith.constant 96 : i32
    %179 = tpu.dynamic_rotate %178 by %c96_i32_66 dim 1 : vector<2x128xf32>, i32 -> vector<2x128xf32>
    %c64_i32_67 = arith.constant 64 : i32
    %180 = tpu.dynamic_rotate %178 by %c64_i32_67 dim 1 : vector<2x128xf32>, i32 -> vector<2x128xf32>
    %c32_i32_68 = arith.constant 32 : i32
    %181 = tpu.dynamic_rotate %178 by %c32_i32_68 dim 1 : vector<2x128xf32>, i32 -> vector<2x128xf32>
    %182 = arith.mulf %179, %147 : vector<2x128xf32>
    %183 = arith.mulf %178, %180 : vector<2x128xf32>
    %184 = arith.addf %182, %183 : vector<2x128xf32>
    %185 = math.tanh %184 : vector<2x128xf32>
    %186 = arith.mulf %181, %185 : vector<2x128xf32>
    %c32_i32_69 = arith.constant 32 : i32
    %187 = tpu.dynamic_rotate %168 by %c32_i32_69 dim 1 : vector<2x128xf32>, i32 -> vector<2x128xf32>
    %188 = arith.select %7, %186, %187 : vector<2x128xi1>, vector<2x128xf32>
    %cst_70 = arith.constant dense<0.000000e+00> : vector<2x128xf32>
    %189 = tpu.matmul %188, %9, %cst_70 {dimension_numbers = #tpu.dot_dimension_numbers<[1], [0], [0], [1], [0, 0, 1, 1], [], []>} : vector<2x128xf32>, vector<128x128xf32>, vector<2x128xf32> -> vector<2x128xf32>
    %190 = arith.addf %189, %12 : vector<2x128xf32>
    %191 = math.tanh %190 : vector<2x128xf32>
    %192 = arith.negf %190 : vector<2x128xf32>
    %193 = math.exp %192 : vector<2x128xf32>
    %cst_71 = arith.constant 1.000000e+00 : f32
    %194 = vector.broadcast %cst_71 : f32 to vector<2x128xf32>
    %195 = arith.addf %194, %193 : vector<2x128xf32>
    %196 = arith.divf %194, %195 : vector<2x128xf32>
    %197 = arith.select %5, %191, %196 : vector<2x128xi1>, vector<2x128xf32>
    %c96_i32_72 = arith.constant 96 : i32
    %198 = tpu.dynamic_rotate %197 by %c96_i32_72 dim 1 : vector<2x128xf32>, i32 -> vector<2x128xf32>
    %c64_i32_73 = arith.constant 64 : i32
    %199 = tpu.dynamic_rotate %197 by %c64_i32_73 dim 1 : vector<2x128xf32>, i32 -> vector<2x128xf32>
    %c32_i32_74 = arith.constant 32 : i32
    %200 = tpu.dynamic_rotate %197 by %c32_i32_74 dim 1 : vector<2x128xf32>, i32 -> vector<2x128xf32>
    %201 = arith.mulf %198, %166 : vector<2x128xf32>
    %202 = arith.mulf %197, %199 : vector<2x128xf32>
    %203 = arith.addf %201, %202 : vector<2x128xf32>
    %204 = math.tanh %203 : vector<2x128xf32>
    %205 = arith.mulf %200, %204 : vector<2x128xf32>
    %c10 = arith.constant 10 : index
    %c0_75 = arith.constant 0 : index
    %206 = vector.load %arg9[%c10, %c0_75] : memref<16x128xf32, #tpu.memory_space<vmem>>, vector<2x128xf32>
    %cst_76 = arith.constant dense<0.000000e+00> : vector<2x128xf32>
    %207 = tpu.matmul %186, %8, %cst_76 {dimension_numbers = #tpu.dot_dimension_numbers<[1], [0], [0], [1], [0, 0, 1, 1], [], []>} : vector<2x128xf32>, vector<128x128xf32>, vector<2x128xf32> -> vector<2x128xf32>
    %208 = arith.addf %206, %207 : vector<2x128xf32>
    %209 = math.tanh %208 : vector<2x128xf32>
    %210 = arith.negf %208 : vector<2x128xf32>
    %211 = math.exp %210 : vector<2x128xf32>
    %cst_77 = arith.constant 1.000000e+00 : f32
    %212 = vector.broadcast %cst_77 : f32 to vector<2x128xf32>
    %213 = arith.addf %212, %211 : vector<2x128xf32>
    %214 = arith.divf %212, %213 : vector<2x128xf32>
    %215 = arith.select %5, %209, %214 : vector<2x128xi1>, vector<2x128xf32>
    %c96_i32_78 = arith.constant 96 : i32
    %216 = tpu.dynamic_rotate %215 by %c96_i32_78 dim 1 : vector<2x128xf32>, i32 -> vector<2x128xf32>
    %c64_i32_79 = arith.constant 64 : i32
    %217 = tpu.dynamic_rotate %215 by %c64_i32_79 dim 1 : vector<2x128xf32>, i32 -> vector<2x128xf32>
    %c32_i32_80 = arith.constant 32 : i32
    %218 = tpu.dynamic_rotate %215 by %c32_i32_80 dim 1 : vector<2x128xf32>, i32 -> vector<2x128xf32>
    %219 = arith.mulf %216, %184 : vector<2x128xf32>
    %220 = arith.mulf %215, %217 : vector<2x128xf32>
    %221 = arith.addf %219, %220 : vector<2x128xf32>
    %222 = math.tanh %221 : vector<2x128xf32>
    %223 = arith.mulf %218, %222 : vector<2x128xf32>
    %c32_i32_81 = arith.constant 32 : i32
    %224 = tpu.dynamic_rotate %205 by %c32_i32_81 dim 1 : vector<2x128xf32>, i32 -> vector<2x128xf32>
    %225 = arith.select %7, %223, %224 : vector<2x128xi1>, vector<2x128xf32>
    %cst_82 = arith.constant dense<0.000000e+00> : vector<2x128xf32>
    %226 = tpu.matmul %225, %9, %cst_82 {dimension_numbers = #tpu.dot_dimension_numbers<[1], [0], [0], [1], [0, 0, 1, 1], [], []>} : vector<2x128xf32>, vector<128x128xf32>, vector<2x128xf32> -> vector<2x128xf32>
    %227 = arith.addf %226, %12 : vector<2x128xf32>
    %228 = math.tanh %227 : vector<2x128xf32>
    %229 = arith.negf %227 : vector<2x128xf32>
    %230 = math.exp %229 : vector<2x128xf32>
    %cst_83 = arith.constant 1.000000e+00 : f32
    %231 = vector.broadcast %cst_83 : f32 to vector<2x128xf32>
    %232 = arith.addf %231, %230 : vector<2x128xf32>
    %233 = arith.divf %231, %232 : vector<2x128xf32>
    %234 = arith.select %5, %228, %233 : vector<2x128xi1>, vector<2x128xf32>
    %c96_i32_84 = arith.constant 96 : i32
    %235 = tpu.dynamic_rotate %234 by %c96_i32_84 dim 1 : vector<2x128xf32>, i32 -> vector<2x128xf32>
    %c64_i32_85 = arith.constant 64 : i32
    %236 = tpu.dynamic_rotate %234 by %c64_i32_85 dim 1 : vector<2x128xf32>, i32 -> vector<2x128xf32>
    %c32_i32_86 = arith.constant 32 : i32
    %237 = tpu.dynamic_rotate %234 by %c32_i32_86 dim 1 : vector<2x128xf32>, i32 -> vector<2x128xf32>
    %238 = arith.mulf %235, %203 : vector<2x128xf32>
    %239 = arith.mulf %234, %236 : vector<2x128xf32>
    %240 = arith.addf %238, %239 : vector<2x128xf32>
    %241 = math.tanh %240 : vector<2x128xf32>
    %242 = arith.mulf %237, %241 : vector<2x128xf32>
    %c12 = arith.constant 12 : index
    %c0_87 = arith.constant 0 : index
    %243 = vector.load %arg9[%c12, %c0_87] : memref<16x128xf32, #tpu.memory_space<vmem>>, vector<2x128xf32>
    %cst_88 = arith.constant dense<0.000000e+00> : vector<2x128xf32>
    %244 = tpu.matmul %223, %8, %cst_88 {dimension_numbers = #tpu.dot_dimension_numbers<[1], [0], [0], [1], [0, 0, 1, 1], [], []>} : vector<2x128xf32>, vector<128x128xf32>, vector<2x128xf32> -> vector<2x128xf32>
    %245 = arith.addf %243, %244 : vector<2x128xf32>
    %246 = math.tanh %245 : vector<2x128xf32>
    %247 = arith.negf %245 : vector<2x128xf32>
    %248 = math.exp %247 : vector<2x128xf32>
    %cst_89 = arith.constant 1.000000e+00 : f32
    %249 = vector.broadcast %cst_89 : f32 to vector<2x128xf32>
    %250 = arith.addf %249, %248 : vector<2x128xf32>
    %251 = arith.divf %249, %250 : vector<2x128xf32>
    %252 = arith.select %5, %246, %251 : vector<2x128xi1>, vector<2x128xf32>
    %c96_i32_90 = arith.constant 96 : i32
    %253 = tpu.dynamic_rotate %252 by %c96_i32_90 dim 1 : vector<2x128xf32>, i32 -> vector<2x128xf32>
    %c64_i32_91 = arith.constant 64 : i32
    %254 = tpu.dynamic_rotate %252 by %c64_i32_91 dim 1 : vector<2x128xf32>, i32 -> vector<2x128xf32>
    %c32_i32_92 = arith.constant 32 : i32
    %255 = tpu.dynamic_rotate %252 by %c32_i32_92 dim 1 : vector<2x128xf32>, i32 -> vector<2x128xf32>
    %256 = arith.mulf %253, %221 : vector<2x128xf32>
    %257 = arith.mulf %252, %254 : vector<2x128xf32>
    %258 = arith.addf %256, %257 : vector<2x128xf32>
    %259 = math.tanh %258 : vector<2x128xf32>
    %260 = arith.mulf %255, %259 : vector<2x128xf32>
    %c32_i32_93 = arith.constant 32 : i32
    %261 = tpu.dynamic_rotate %242 by %c32_i32_93 dim 1 : vector<2x128xf32>, i32 -> vector<2x128xf32>
    %262 = arith.select %7, %260, %261 : vector<2x128xi1>, vector<2x128xf32>
    %cst_94 = arith.constant dense<0.000000e+00> : vector<2x128xf32>
    %263 = tpu.matmul %262, %9, %cst_94 {dimension_numbers = #tpu.dot_dimension_numbers<[1], [0], [0], [1], [0, 0, 1, 1], [], []>} : vector<2x128xf32>, vector<128x128xf32>, vector<2x128xf32> -> vector<2x128xf32>
    %264 = arith.addf %263, %12 : vector<2x128xf32>
    %265 = math.tanh %264 : vector<2x128xf32>
    %266 = arith.negf %264 : vector<2x128xf32>
    %267 = math.exp %266 : vector<2x128xf32>
    %cst_95 = arith.constant 1.000000e+00 : f32
    %268 = vector.broadcast %cst_95 : f32 to vector<2x128xf32>
    %269 = arith.addf %268, %267 : vector<2x128xf32>
    %270 = arith.divf %268, %269 : vector<2x128xf32>
    %271 = arith.select %5, %265, %270 : vector<2x128xi1>, vector<2x128xf32>
    %c96_i32_96 = arith.constant 96 : i32
    %272 = tpu.dynamic_rotate %271 by %c96_i32_96 dim 1 : vector<2x128xf32>, i32 -> vector<2x128xf32>
    %c64_i32_97 = arith.constant 64 : i32
    %273 = tpu.dynamic_rotate %271 by %c64_i32_97 dim 1 : vector<2x128xf32>, i32 -> vector<2x128xf32>
    %c32_i32_98 = arith.constant 32 : i32
    %274 = tpu.dynamic_rotate %271 by %c32_i32_98 dim 1 : vector<2x128xf32>, i32 -> vector<2x128xf32>
    %275 = arith.mulf %272, %240 : vector<2x128xf32>
    %276 = arith.mulf %271, %273 : vector<2x128xf32>
    %277 = arith.addf %275, %276 : vector<2x128xf32>
    %278 = math.tanh %277 : vector<2x128xf32>
    %279 = arith.mulf %274, %278 : vector<2x128xf32>
    %c14 = arith.constant 14 : index
    %c0_99 = arith.constant 0 : index
    %280 = vector.load %arg9[%c14, %c0_99] : memref<16x128xf32, #tpu.memory_space<vmem>>, vector<2x128xf32>
    %cst_100 = arith.constant dense<0.000000e+00> : vector<2x128xf32>
    %281 = tpu.matmul %260, %8, %cst_100 {dimension_numbers = #tpu.dot_dimension_numbers<[1], [0], [0], [1], [0, 0, 1, 1], [], []>} : vector<2x128xf32>, vector<128x128xf32>, vector<2x128xf32> -> vector<2x128xf32>
    %282 = arith.addf %280, %281 : vector<2x128xf32>
    %283 = math.tanh %282 : vector<2x128xf32>
    %284 = arith.negf %282 : vector<2x128xf32>
    %285 = math.exp %284 : vector<2x128xf32>
    %cst_101 = arith.constant 1.000000e+00 : f32
    %286 = vector.broadcast %cst_101 : f32 to vector<2x128xf32>
    %287 = arith.addf %286, %285 : vector<2x128xf32>
    %288 = arith.divf %286, %287 : vector<2x128xf32>
    %289 = arith.select %5, %283, %288 : vector<2x128xi1>, vector<2x128xf32>
    %c96_i32_102 = arith.constant 96 : i32
    %290 = tpu.dynamic_rotate %289 by %c96_i32_102 dim 1 : vector<2x128xf32>, i32 -> vector<2x128xf32>
    %c64_i32_103 = arith.constant 64 : i32
    %291 = tpu.dynamic_rotate %289 by %c64_i32_103 dim 1 : vector<2x128xf32>, i32 -> vector<2x128xf32>
    %c32_i32_104 = arith.constant 32 : i32
    %292 = tpu.dynamic_rotate %289 by %c32_i32_104 dim 1 : vector<2x128xf32>, i32 -> vector<2x128xf32>
    %293 = arith.mulf %290, %258 : vector<2x128xf32>
    %294 = arith.mulf %289, %291 : vector<2x128xf32>
    %295 = arith.addf %293, %294 : vector<2x128xf32>
    %296 = math.tanh %295 : vector<2x128xf32>
    %297 = arith.mulf %292, %296 : vector<2x128xf32>
    %c32_i32_105 = arith.constant 32 : i32
    %298 = tpu.dynamic_rotate %279 by %c32_i32_105 dim 1 : vector<2x128xf32>, i32 -> vector<2x128xf32>
    %299 = arith.select %7, %297, %298 : vector<2x128xi1>, vector<2x128xf32>
    %cst_106 = arith.constant dense<0.000000e+00> : vector<2x128xf32>
    %300 = tpu.matmul %299, %9, %cst_106 {dimension_numbers = #tpu.dot_dimension_numbers<[1], [0], [0], [1], [0, 0, 1, 1], [], []>} : vector<2x128xf32>, vector<128x128xf32>, vector<2x128xf32> -> vector<2x128xf32>
    %301 = arith.addf %300, %12 : vector<2x128xf32>
    %302 = math.tanh %301 : vector<2x128xf32>
    %303 = arith.negf %301 : vector<2x128xf32>
    %304 = math.exp %303 : vector<2x128xf32>
    %cst_107 = arith.constant 1.000000e+00 : f32
    %305 = vector.broadcast %cst_107 : f32 to vector<2x128xf32>
    %306 = arith.addf %305, %304 : vector<2x128xf32>
    %307 = arith.divf %305, %306 : vector<2x128xf32>
    %308 = arith.select %5, %302, %307 : vector<2x128xi1>, vector<2x128xf32>
    %c96_i32_108 = arith.constant 96 : i32
    %309 = tpu.dynamic_rotate %308 by %c96_i32_108 dim 1 : vector<2x128xf32>, i32 -> vector<2x128xf32>
    %c64_i32_109 = arith.constant 64 : i32
    %310 = tpu.dynamic_rotate %308 by %c64_i32_109 dim 1 : vector<2x128xf32>, i32 -> vector<2x128xf32>
    %c32_i32_110 = arith.constant 32 : i32
    %311 = tpu.dynamic_rotate %308 by %c32_i32_110 dim 1 : vector<2x128xf32>, i32 -> vector<2x128xf32>
    %312 = arith.mulf %309, %277 : vector<2x128xf32>
    %313 = arith.mulf %308, %310 : vector<2x128xf32>
    %314 = arith.addf %312, %313 : vector<2x128xf32>
    %315 = math.tanh %314 : vector<2x128xf32>
    %316 = arith.mulf %311, %315 : vector<2x128xf32>
    %c0_111 = arith.constant 0 : index
    %c0_112 = arith.constant 0 : index
    %317 = vector.load %arg6[%c0_111, %c0_112] : memref<1x128xf32, #tpu.memory_space<vmem>>, vector<1x128xf32>
    %318 = vector.broadcast %317 : vector<1x128xf32> to vector<2x128xf32>
    %319 = arith.mulf %316, %318 : vector<2x128xf32>
    %cst_113 = arith.constant dense<0.000000e+00> : vector<2xf32>
    %320 = vector.multi_reduction <add>, %319, %cst_113 [1] : vector<2x128xf32> to vector<2xf32>
    %321 = vector.shape_cast %320 : vector<2xf32> to vector<2x1xf32>
    %c0_114 = arith.constant 0 : index
    %322 = memref.load %arg7[%c0_114] : memref<1xf32, #tpu.memory_space<smem>>
    %323 = vector.broadcast %322 : f32 to vector<2x1xf32>
    %324 = arith.addf %321, %323 : vector<2x1xf32>
    %c0_115 = arith.constant 0 : index
    %c0_116 = arith.constant 0 : index
    %325 = vector.load %arg8[%c0_115, %c0_116] : memref<2x1xf32, #tpu.memory_space<vmem>>, vector<2x1xf32>
    tpu.vector_store %arg8[%c0_115, %c0_116], %324 {strides = array<i32>} : memref<2x1xf32, #tpu.memory_space<vmem>>, vector<2x1xf32>,
    return
  }
}

</mosaic_0001>

<llo_original>
// kernel: tpu_custom_call.1
$region0: #{tpu_custom_call.1}
  #allocation0 [shape = 'u32[]', space=smem, size = 0x4, offset = 0x4, fixed_abs, tag = 'smem constant byte address 0x4 - core index']
  #allocation1 [shape = 'u32[144,128]{1,0:T(1,128)}', space=vmem, size = 0x12000, scoped, tag = 'internal scratch']
  #allocation2 [shape = 'f32[16,128]{1,0:T(8,128)}', space=vmem, size = 0x2000, scoped, tag = 'scratch operand']
  #allocation3 [shape = 'f32[1]{0:T(128)S(6)}', space=smem, size = 0x200, scoped, tag = 'scoped memory for tpu_custom_call.1']
  %s0 = inlined_call_operand.vmem [shape: f32[16,6], index: 0, kind: input, shape index: {}]
  %s1 = inlined_call_operand.vmem [shape: f32[6,128], index: 1, kind: input, shape index: {}]
  %s2 = inlined_call_operand.vmem [shape: f32[1,128], index: 2, kind: input, shape index: {}]
  %s3 = inlined_call_operand.hbm [shape: f32[128,128], index: 3, kind: input, shape index: {}]
  %s4 = inlined_call_operand.hbm [shape: f32[128,128], index: 4, kind: input, shape index: {}]
  %s5 = inlined_call_operand.vmem [shape: f32[1,128], index: 5, kind: input, shape index: {}]
  %s6 = inlined_call_operand.vmem [shape: f32[1,128], index: 6, kind: input, shape index: {}]
  %s7 = inlined_call_operand.<no memory space> [shape: f32[1], index: 7, kind: input, shape index: {}]
  %s8 = inlined_call_operand.vmem [shape: f32[2,1], index: 8, kind: output, shape index: {}]
  %s9 = sld [smem:[#allocation0]]
  $region50: #{tpu_custom_call.1} parent=0
    _
  %s11 = ssub.s32 1, %s9
  %s12 = scalar_select 0, %s11, %s9
  %13 = sst [smem:[#allocation3]] %s7
  $region1: #{tpu_custom_call.1} parent=0
    #allocation4 [shape = 'u8[65536]{0}', space=vmem, size = 0x10000, scoped, tag = 'input window, operand 3, single buffered']
    #allocation5 [shape = 's32[1]{0}', space=sflag, size = 0x4, scoped, tag = 'scoped memory for tpu_custom_call.1']
    #allocation6 [shape = 'u8[65536]{0}', space=vmem, size = 0x10000, scoped, tag = 'input window, operand 4, single buffered']
    #allocation7 [shape = 's32[1]{0}', space=sflag, size = 0x4, scoped, tag = 'scoped memory for tpu_custom_call.1']
    %14 = vsyncpa [#allocation5], 0
    %15 = vsyncpa [#allocation7], 0
    // Predicated region
    $region2: #{tpu_custom_call.1} parent=1 // pred_check
      _
    $region3: #{tpu_custom_call.1} parent=1 // pred_check_branch
      %17 = sbr.rel (0) target = $region5
    $region4: #{tpu_custom_call.1} parent=1 // pred_region
      _
    $region5: #{tpu_custom_call.1} parent=1 // pred_fallthru
      _
    // Predicated region
    $region6: #{tpu_custom_call.1} parent=1 // pred_check
      _
    $region7: #{tpu_custom_call.1} parent=1 // pred_check_branch
      %19 = sbr.rel (0) target = $region9
    $region8: #{tpu_custom_call.1} parent=1 // pred_region
      _
    $region9: #{tpu_custom_call.1} parent=1 // pred_fallthru
      _
    // Predicated region
    $region10: #{tpu_custom_call.1} parent=1 // pred_check
      _
    $region11: #{tpu_custom_call.1} parent=1 // pred_check_branch
      %21 = sbr.rel (0) target = $region13
    $region12: #{tpu_custom_call.1} parent=1 // pred_region
      _
    $region13: #{tpu_custom_call.1} parent=1 // pred_fallthru
      _
    // Predicated region
    $region14: #{tpu_custom_call.1} parent=1 // pred_check
      _
    $region15: #{tpu_custom_call.1} parent=1 // pred_check_branch
      %23 = sbr.rel (0) target = $region17
    $region16: #{tpu_custom_call.1} parent=1 // pred_region
      %s25 = ssub.s32 2048, 2048
      %26 = vsyncadd [#allocation5], %s25
      %s27 = sshll.u32 [#allocation4], 4
      %s28 = int_to_ptr.vmem [resolvable:$true] %s27
      %33 = dma.hbm_to_vmem [thread:$0]  %s3, 2048, %s28, [#allocation5], 128, 128, 8
    $region17: #{tpu_custom_call.1} parent=1 // pred_fallthru
      _
    // Predicated region
    $region18: #{tpu_custom_call.1} parent=1 // pred_check
      _
    $region19: #{tpu_custom_call.1} parent=1 // pred_check_branch
      %35 = sbr.rel (0) target = $region21
    $region20: #{tpu_custom_call.1} parent=1 // pred_region
      %s37 = ssub.s32 2048, 2048
      %38 = vsyncadd [#allocation7], %s37
      %s39 = sshll.u32 [#allocation6], 4
      %s40 = int_to_ptr.vmem [resolvable:$true] %s39
      %45 = dma.hbm_to_vmem [thread:$0]  %s4, 2048, %s40, [#allocation7], 128, 128, 8
    $region21: #{tpu_custom_call.1} parent=1 // pred_fallthru
      _
    // Predicated region
    $region22: #{tpu_custom_call.1} parent=1 // pred_check
      _
    $region23: #{tpu_custom_call.1} parent=1 // pred_check_branch
      %47 = sbr.rel (0) target = $region25
    $region24: #{tpu_custom_call.1} parent=1 // pred_region
      _
    $region25: #{tpu_custom_call.1} parent=1 // pred_fallthru
      _
    // Predicated region
    $region26: #{tpu_custom_call.1} parent=1 // pred_check
      _
    $region27: #{tpu_custom_call.1} parent=1 // pred_check_branch
      %49 = sbr.rel (0) target = $region29
    $region28: #{tpu_custom_call.1} parent=1 // pred_region
      _
    $region29: #{tpu_custom_call.1} parent=1 // pred_fallthru
      _
    // Predicated region
    $region30: #{tpu_custom_call.1} parent=1 // pred_check
      _
    $region31: #{tpu_custom_call.1} parent=1 // pred_check_branch
      %51 = sbr.rel (0) target = $region33
    $region32: #{tpu_custom_call.1} parent=1 // pred_region
      _
    $region33: #{tpu_custom_call.1} parent=1 // pred_fallthru
      _
    // Predicated region
    $region34: #{tpu_custom_call.1} parent=1 // pred_check
      _
    $region35: #{tpu_custom_call.1} parent=1 // pred_check_branch
      %53 = sbr.rel (0) target = $region37
    $region36: #{tpu_custom_call.1} parent=1 // pred_region
      %54 = dma.done [#allocation5], 2048
    $region37: #{tpu_custom_call.1} parent=1 // pred_fallthru
      _
    // Predicated region
    $region38: #{tpu_custom_call.1} parent=1 // pred_check
      _
    $region39: #{tpu_custom_call.1} parent=1 // pred_check_branch
      %56 = sbr.rel (0) target = $region41
    $region40: #{tpu_custom_call.1} parent=1 // pred_region
      %57 = dma.done [#allocation7], 2048
    $region41: #{tpu_custom_call.1} parent=1 // pred_fallthru
      _
    %v58 = vlaneseq
    %v59 = vand.u32 %v58, 127
    %vm60 = vcmp.ge.s32.totalorder %v59, 64
    %vm61 = vcmp.lt.s32.totalorder %v59, 96
    %vm62 = vmand %vm60, %vm61
    %vm63 = vcmp.lt.s32.totalorder %v59, 32
    %v64 = vld [vmem:[#allocation4] sm:$0xff]
    %v65 = vld [vmem:[#allocation4 + $0x8] sm:$0xff]
    %v66 = vld [vmem:[#allocation4 + $0x10] sm:$0xff]
    %v67 = vld [vmem:[#allocation4 + $0x18] sm:$0xff]
    %v68 = vld [vmem:[#allocation4 + $0x20] sm:$0xff]
    %v69 = vld [vmem:[#allocation4 + $0x28] sm:$0xff]
    %v70 = vld [vmem:[#allocation4 + $0x30] sm:$0xff]
    %v71 = vld [vmem:[#allocation4 + $0x38] sm:$0xff]
    %v72 = vld [vmem:[#allocation4 + $0x40] sm:$0xff]
    %v73 = vld [vmem:[#allocation4 + $0x48] sm:$0xff]
    %v74 = vld [vmem:[#allocation4 + $0x50] sm:$0xff]
    %v75 = vld [vmem:[#allocation4 + $0x58] sm:$0xff]
    %v76 = vld [vmem:[#allocation4 + $0x60] sm:$0xff]
    %v77 = vld [vmem:[#allocation4 + $0x68] sm:$0xff]
    %v78 = vld [vmem:[#allocation4 + $0x70] sm:$0xff]
    %v79 = vld [vmem:[#allocation4 + $0x78] sm:$0xff]
    %v80 = vld [vmem:[#allocation6] sm:$0xff]
    %v81 = vld [vmem:[#allocation6 + $0x8] sm:$0xff]
    %v82 = vld [vmem:[#allocation6 + $0x10] sm:$0xff]
    %v83 = vld [vmem:[#allocation6 + $0x18] sm:$0xff]
    %v84 = vld [vmem:[#allocation6 + $0x20] sm:$0xff]
    %v85 = vld [vmem:[#allocation6 + $0x28] sm:$0xff]
    %v86 = vld [vmem:[#allocation6 + $0x30] sm:$0xff]
    %v87 = vld [vmem:[#allocation6 + $0x38] sm:$0xff]
    %v88 = vld [vmem:[#allocation6 + $0x40] sm:$0xff]
    %v89 = vld [vmem:[#allocation6 + $0x48] sm:$0xff]
    %v90 = vld [vmem:[#allocation6 + $0x50] sm:$0xff]
    %v91 = vld [vmem:[#allocation6 + $0x58] sm:$0xff]
    %v92 = vld [vmem:[#allocation6 + $0x60] sm:$0xff]
    %v93 = vld [vmem:[#allocation6 + $0x68] sm:$0xff]
    %v94 = vld [vmem:[#allocation6 + $0x70] sm:$0xff]
    %v95 = vld [vmem:[#allocation6 + $0x78] sm:$0xff]
    %v96 = vld [vmem:[%s5] sm:$0x1]
    %v98 = vlaneseq
    %v99 = vshrl.u32 %v98, 7
    %v100 = vsub.s32 0, %v99
    %v101 = vrot.slane %v96, %v100
    %v103 = vld [vmem:[%s0] sm:$0xff]
    %v104 = vld [vmem:[%s0 + $0x8] sm:$0xff]
    %v105 = vld [vmem:[%s1] sm:$0x3f]
    %v106 = vld [vmem:[%s2] sm:$0x1]
    %v108 = vlaneseq
    %v109 = vshrl.u32 %v108, 7
    %v110 = vsub.s32 0, %v109
    %v111 = vrot.slane %v106, %v110
    %vm113 = vcmask 48128
    %v115 = vsel %vm113, %v103, 0
    %v118 = vsel %vm113, %v104, 0
    %vm120 = vcmask 1045504
    %v122 = vsel %vm120, %v105, 0
    %124 = vmatprep.subr.mxu0 0.0
    %125 = vmatpush1.msra.mxu0 0.0
    %126 = vmatprep.subr.mxu0 0.0
    %127 = vmatpush1.msra.mxu0 0.0
    %128 = vmatprep.subr.mxu0 0.0
    %129 = vmatpush1.msra.mxu0 0.0
    %130 = vmatprep.subr.mxu0 0.0
    %131 = vmatpush1.msra.mxu0 0.0
    %132 = vmatprep.subr.mxu0 0.0
    %133 = vmatpush1.msra.mxu0 0.0
    %134 = vmatprep.subr.mxu0 0.0
    %135 = vmatpush1.msra.mxu0 0.0
    %136 = vmatprep.subr.mxu0 0.0
    %137 = vmatpush1.msra.mxu0 0.0
    %138 = vmatprep.subr.mxu0 0.0
    %139 = vmatpush1.msra.mxu0 0.0
    %140 = vmatprep.subr.mxu0 0.0
    %141 = vmatpush1.msra.mxu0 0.0
    %142 = vmatprep.subr.mxu0 0.0
    %143 = vmatpush1.msra.mxu0 0.0
    %144 = vmatprep.subr.mxu0 0.0
    %145 = vmatpush1.msra.mxu0 0.0
    %146 = vmatprep.subr.mxu0 0.0
    %147 = vmatpush1.msra.mxu0 0.0
    %148 = vmatprep.subr.mxu0 0.0
    %149 = vmatpush1.msra.mxu0 0.0
    %150 = vmatprep.subr.mxu0 0.0
    %151 = vmatpush1.msra.mxu0 0.0
    %152 = vmatprep.subr.mxu0 0.0
    %153 = vmatpush1.msra.mxu0 0.0
    %154 = vmatprep.subr.mxu0 0.0
    %155 = vmatpush1.msra.mxu0 %v122
    %156 = vmatprep.subr.mxu0 0.0
    %157 = vmatpush2.msra.mxu0 0.0
    %158 = vmatprep.subr.mxu0 0.0
    %159 = vmatpush2.msra.mxu0 0.0
    %160 = vmatprep.subr.mxu0 0.0
    %161 = vmatpush2.msra.mxu0 0.0
    %162 = vmatprep.subr.mxu0 0.0
    %163 = vmatpush2.msra.mxu0 0.0
    %164 = vmatprep.subr.mxu0 0.0
    %165 = vmatpush2.msra.mxu0 0.0
    %166 = vmatprep.subr.mxu0 0.0
    %167 = vmatpush2.msra.mxu0 0.0
    %168 = vmatprep.subr.mxu0 0.0
    %169 = vmatpush2.msra.mxu0 0.0
    %170 = vmatprep.subr.mxu0 0.0
    %171 = vmatpush2.msra.mxu0 0.0
    %172 = vmatprep.subr.mxu0 0.0
    %173 = vmatpush2.msra.mxu0 0.0
    %174 = vmatprep.subr.mxu0 0.0
    %175 = vmatpush2.msra.mxu0 0.0
    %176 = vmatprep.subr.mxu0 0.0
    %177 = vmatpush2.msra.mxu0 0.0
    %178 = vmatprep.subr.mxu0 0.0
    %179 = vmatpush2.msra.mxu0 0.0
    %180 = vmatprep.subr.mxu0 0.0
    %181 = vmatpush2.msra.mxu0 0.0
    %182 = vmatprep.subr.mxu0 0.0
    %183 = vmatpush2.msra.mxu0 0.0
    %184 = vmatprep.subr.mxu0 0.0
    %185 = vmatpush2.msra.mxu0 0.0
    %186 = vmatprep.subr.mxu0 0.0
    %187 = vmatpush2.msra.mxu0 0.0
    %188 = vmatprep.mubr.f32.mxu0 0.0
    %189 = vmatmul.mubr.f32.gmra.mxu0 %v115
    %v190 = vpop.f32.mrf.mxu0
    %v191 = vadd.f32 %v111, %v190
    %v192 = vpop.f32.mrf.mxu0
    %193 = vmatprep.mubr.f32.mxu0 0.0
    %194 = vmatmul.mubr.f32.gmra.mxu0 %v118
    %v195 = vpop.f32.mrf.mxu0
    %v196 = vadd.f32 %v111, %v195
    %v197 = vpop.f32.mrf.mxu0
    %198 = vdwg.mxu0
    %199 = vst [vmem:[#allocation2] sm:$0xff] %v191
    %200 = vst [vmem:[#allocation2 + $0x8] sm:$0xff] %v196
    %v201 = vld [vmem:[#allocation2] sm:$0x3]
    %202 = vmatprep.subr.mxu0 0.0
    %203 = vmatpush1.msra.mxu0 %v79
    %204 = vmatprep.subr.mxu0 0.0
    %205 = vmatpush1.msra.mxu0 %v78
    %206 = vmatprep.subr.mxu0 0.0
    %207 = vmatpush1.msra.mxu0 %v77
    %208 = vmatprep.subr.mxu0 0.0
    %209 = vmatpush1.msra.mxu0 %v76
    %210 = vmatprep.subr.mxu0 0.0
    %211 = vmatpush1.msra.mxu0 %v75
    %212 = vmatprep.subr.mxu0 0.0
    %213 = vmatpush1.msra.mxu0 %v74
    %214 = vmatprep.subr.mxu0 0.0
    %215 = vmatpush1.msra.mxu0 %v73
    %216 = vmatprep.subr.mxu0 0.0
    %217 = vmatpush1.msra.mxu0 %v72
    %218 = vmatprep.subr.mxu0 0.0
    %219 = vmatpush1.msra.mxu0 %v71
    %220 = vmatprep.subr.mxu0 0.0
    %221 = vmatpush1.msra.mxu0 %v70
    %222 = vmatprep.subr.mxu0 0.0
    %223 = vmatpush1.msra.mxu0 %v69
    %224 = vmatprep.subr.mxu0 0.0
    %225 = vmatpush1.msra.mxu0 %v68
    %226 = vmatprep.subr.mxu0 0.0
    %227 = vmatpush1.msra.mxu0 %v67
    %228 = vmatprep.subr.mxu0 0.0
    %229 = vmatpush1.msra.mxu0 %v66
    %230 = vmatprep.subr.mxu0 0.0
    %231 = vmatpush1.msra.mxu0 %v65
    %232 = vmatprep.subr.mxu0 0.0
    %233 = vmatpush1.msra.mxu0 %v64
    %234 = vmatprep.subr.mxu0 0.0
    %235 = vmatpush2.msra.mxu0 0.0
    %236 = vmatprep.subr.mxu0 0.0
    %237 = vmatpush2.msra.mxu0 0.0
    %238 = vmatprep.subr.mxu0 0.0
    %239 = vmatpush2.msra.mxu0 0.0
    %240 = vmatprep.subr.mxu0 0.0
    %241 = vmatpush2.msra.mxu0 0.0
    %242 = vmatprep.subr.mxu0 0.0
    %243 = vmatpush2.msra.mxu0 0.0
    %244 = vmatprep.subr.mxu0 0.0
    %245 = vmatpush2.msra.mxu0 0.0
    %246 = vmatprep.subr.mxu0 0.0
    %247 = vmatpush2.msra.mxu0 0.0
    %248 = vmatprep.subr.mxu0 0.0
    %249 = vmatpush2.msra.mxu0 0.0
    %250 = vmatprep.subr.mxu0 0.0
    %251 = vmatpush2.msra.mxu0 0.0
    %252 = vmatprep.subr.mxu0 0.0
    %253 = vmatpush2.msra.mxu0 0.0
    %254 = vmatprep.subr.mxu0 0.0
    %255 = vmatpush2.msra.mxu0 0.0
    %256 = vmatprep.subr.mxu0 0.0
    %257 = vmatpush2.msra.mxu0 0.0
    %258 = vmatprep.subr.mxu0 0.0
    %259 = vmatpush2.msra.mxu0 0.0
    %260 = vmatprep.subr.mxu0 0.0
    %261 = vmatpush2.msra.mxu0 0.0
    %262 = vmatprep.subr.mxu0 0.0
    %263 = vmatpush2.msra.mxu0 0.0
    %264 = vmatprep.subr.mxu0 0.0
    %265 = vmatpush2.msra.mxu0 0.0
    %266 = vmatprep.mubr.f32.mxu0 0.0
    %267 = vmatmul.mubr.f32.gmra.mxu0 0.0
    %v268 = vpop.f32.mrf.mxu0
    %v269 = vadd.f32 0.0, %v268
    %v270 = vpop.f32.mrf.mxu0
    %271 = vdwg.mxu0
    %v272 = vadd.f32 %v201, %v269
    %v273 = vtanh.pop %v272
    %v274 = vxor.u32 %v272, 2147483648
    %v275 = vmul.f32 %v274, 1.442695
    %v276 = vpow.pop %v275
    %v277 = vadd.f32 %v276, 1.0
    %v278 = vrcp.pop %v277
    %v279 = vmul.f32 1.0, %v278
    %v280 = vsel %vm62, %v273, %v279
    %281 = vrot.lane.b32.xlu0 %v280, 96
    %v282 = vpop.permute.xlu0 %281
    %283 = vrot.lane.b32.xlu0 %v280, 64
    %v284 = vpop.permute.xlu0 %283
    %285 = vrot.lane.b32.xlu0 %v280, 32
    %v286 = vpop.permute.xlu0 %285
    %v287 = vmul.f32 %v282, 0.0
    %v288 = vmul.f32 %v280, %v284
    %v289 = vadd.f32 %v287, %v288
    %v290 = vtanh.pop %v289
    %v291 = vmul.f32 %v286, %v290
    %292 = vrot.lane.b32.xlu0 0.0, 32
    %v293 = vpop.permute.xlu0 %292
    %v294 = vsel %vm63, %v291, %v293
    %295 = vmatprep.subr.mxu0 0.0
    %296 = vmatpush1.msra.mxu0 %v95
    %297 = vmatprep.subr.mxu0 0.0
    %298 = vmatpush1.msra.mxu0 %v94
    %299 = vmatprep.subr.mxu0 0.0
    %300 = vmatpush1.msra.mxu0 %v93
    %301 = vmatprep.subr.mxu0 0.0
    %302 = vmatpush1.msra.mxu0 %v92
    %303 = vmatprep.subr.mxu0 0.0
    %304 = vmatpush1.msra.mxu0 %v91
    %305 = vmatprep.subr.mxu0 0.0
    %306 = vmatpush1.msra.mxu0 %v90
    %307 = vmatprep.subr.mxu0 0.0
    %308 = vmatpush1.msra.mxu0 %v89
    %309 = vmatprep.subr.mxu0 0.0
    %310 = vmatpush1.msra.mxu0 %v88
    %311 = vmatprep.subr.mxu0 0.0
    %312 = vmatpush1.msra.mxu0 %v87
    %313 = vmatprep.subr.mxu0 0.0
    %314 = vmatpush1.msra.mxu0 %v86
    %315 = vmatprep.subr.mxu0 0.0
    %316 = vmatpush1.msra.mxu0 %v85
    %317 = vmatprep.subr.mxu0 0.0
    %318 = vmatpush1.msra.mxu0 %v84
    %319 = vmatprep.subr.mxu0 0.0
    %320 = vmatpush1.msra.mxu0 %v83
    %321 = vmatprep.subr.mxu0 0.0
    %322 = vmatpush1.msra.mxu0 %v82
    %323 = vmatprep.subr.mxu0 0.0
    %324 = vmatpush1.msra.mxu0 %v81
    %325 = vmatprep.subr.mxu0 0.0
    %326 = vmatpush1.msra.mxu0 %v80
    %327 = vmatprep.subr.mxu0 0.0
    %328 = vmatpush2.msra.mxu0 0.0
    %329 = vmatprep.subr.mxu0 0.0
    %330 = vmatpush2.msra.mxu0 0.0
    %331 = vmatprep.subr.mxu0 0.0
    %332 = vmatpush2.msra.mxu0 0.0
    %333 = vmatprep.subr.mxu0 0.0
    %334 = vmatpush2.msra.mxu0 0.0
    %335 = vmatprep.subr.mxu0 0.0
    %336 = vmatpush2.msra.mxu0 0.0
    %337 = vmatprep.subr.mxu0 0.0
    %338 = vmatpush2.msra.mxu0 0.0
    %339 = vmatprep.subr.mxu0 0.0
    %340 = vmatpush2.msra.mxu0 0.0
    %341 = vmatprep.subr.mxu0 0.0
    %342 = vmatpush2.msra.mxu0 0.0
    %343 = vmatprep.subr.mxu0 0.0
    %344 = vmatpush2.msra.mxu0 0.0
    %345 = vmatprep.subr.mxu0 0.0
    %346 = vmatpush2.msra.mxu0 0.0
    %347 = vmatprep.subr.mxu0 0.0
    %348 = vmatpush2.msra.mxu0 0.0
    %349 = vmatprep.subr.mxu0 0.0
    %350 = vmatpush2.msra.mxu0 0.0
    %351 = vmatprep.subr.mxu0 0.0
    %352 = vmatpush2.msra.mxu0 0.0
    %353 = vmatprep.subr.mxu0 0.0
    %354 = vmatpush2.msra.mxu0 0.0
    %355 = vmatprep.subr.mxu0 0.0
    %356 = vmatpush2.msra.mxu0 0.0
    %357 = vmatprep.subr.mxu0 0.0
    %358 = vmatpush2.msra.mxu0 0.0
    %359 = vmatprep.mubr.f32.mxu0 0.0
    %360 = vmatmul.mubr.f32.gmra.mxu0 %v294
    %v361 = vpop.f32.mrf.mxu0
    %v362 = vadd.f32 %v101, %v361
    %v363 = vpop.f32.mrf.mxu0
    %364 = vdwg.mxu0
    %v365 = vtanh.pop %v362
    %v366 = vxor.u32 %v362, 2147483648
    %v367 = vmul.f32 %v366, 1.442695
    %v368 = vpow.pop %v367
    %v369 = vadd.f32 %v368, 1.0
    %v370 = vrcp.pop %v369
    %v371 = vmul.f32 1.0, %v370
    %v372 = vsel %vm62, %v365, %v371
    %373 = vrot.lane.b32.xlu0 %v372, 96
    %v374 = vpop.permute.xlu0 %373
    %375 = vrot.lane.b32.xlu0 %v372, 64
    %v376 = vpop.permute.xlu0 %375
    %377 = vrot.lane.b32.xlu0 %v372, 32
    %v378 = vpop.permute.xlu0 %377
    %v379 = vmul.f32 %v374, 0.0
    %v380 = vmul.f32 %v372, %v376
    %v381 = vadd.f32 %v379, %v380
    %v382 = vtanh.pop %v381
    %v383 = vmul.f32 %v378, %v382
    %v384 = vld [vmem:[#allocation2 + $0x2] sm:$0x3]
    %385 = vmatprep.subr.mxu0 0.0
    %386 = vmatpush1.msra.mxu0 %v79
    %387 = vmatprep.subr.mxu0 0.0
    %388 = vmatpush1.msra.mxu0 %v78
    %389 = vmatprep.subr.mxu0 0.0
    %390 = vmatpush1.msra.mxu0 %v77
    %391 = vmatprep.subr.mxu0 0.0
    %392 = vmatpush1.msra.mxu0 %v76
    %393 = vmatprep.subr.mxu0 0.0
    %394 = vmatpush1.msra.mxu0 %v75
    %395 = vmatprep.subr.mxu0 0.0
    %396 = vmatpush1.msra.mxu0 %v74
    %397 = vmatprep.subr.mxu0 0.0
    %398 = vmatpush1.msra.mxu0 %v73
    %399 = vmatprep.subr.mxu0 0.0
    %400 = vmatpush1.msra.mxu0 %v72
    %401 = vmatprep.subr.mxu0 0.0
    %402 = vmatpush1.msra.mxu0 %v71
    %403 = vmatprep.subr.mxu0 0.0
    %404 = vmatpush1.msra.mxu0 %v70
    %405 = vmatprep.subr.mxu0 0.0
    %406 = vmatpush1.msra.mxu0 %v69
    %407 = vmatprep.subr.mxu0 0.0
    %408 = vmatpush1.msra.mxu0 %v68
    %409 = vmatprep.subr.mxu0 0.0
    %410 = vmatpush1.msra.mxu0 %v67
    %411 = vmatprep.subr.mxu0 0.0
    %412 = vmatpush1.msra.mxu0 %v66
    %413 = vmatprep.subr.mxu0 0.0
    %414 = vmatpush1.msra.mxu0 %v65
    %415 = vmatprep.subr.mxu0 0.0
    %416 = vmatpush1.msra.mxu0 %v64
    %417 = vmatprep.subr.mxu0 0.0
    %418 = vmatpush2.msra.mxu0 0.0
    %419 = vmatprep.subr.mxu0 0.0
    %420 = vmatpush2.msra.mxu0 0.0
    %421 = vmatprep.subr.mxu0 0.0
    %422 = vmatpush2.msra.mxu0 0.0
    %423 = vmatprep.subr.mxu0 0.0
    %424 = vmatpush2.msra.mxu0 0.0
    %425 = vmatprep.subr.mxu0 0.0
    %426 = vmatpush2.msra.mxu0 0.0
    %427 = vmatprep.subr.mxu0 0.0
    %428 = vmatpush2.msra.mxu0 0.0
    %429 = vmatprep.subr.mxu0 0.0
    %430 = vmatpush2.msra.mxu0 0.0
    %431 = vmatprep.subr.mxu0 0.0
    %432 = vmatpush2.msra.mxu0 0.0
    %433 = vmatprep.subr.mxu0 0.0
    %434 = vmatpush2.msra.mxu0 0.0
    %435 = vmatprep.subr.mxu0 0.0
    %436 = vmatpush2.msra.mxu0 0.0
    %437 = vmatprep.subr.mxu0 0.0
    %438 = vmatpush2.msra.mxu0 0.0
    %439 = vmatprep.subr.mxu0 0.0
    %440 = vmatpush2.msra.mxu0 0.0
    %441 = vmatprep.subr.mxu0 0.0
    %442 = vmatpush2.msra.mxu0 0.0
    %443 = vmatprep.subr.mxu0 0.0
    %444 = vmatpush2.msra.mxu0 0.0
    %445 = vmatprep.subr.mxu0 0.0
    %446 = vmatpush2.msra.mxu0 0.0
    %447 = vmatprep.subr.mxu0 0.0
    %448 = vmatpush2.msra.mxu0 0.0
    %449 = vmatprep.mubr.f32.mxu0 0.0
    %450 = vmatmul.mubr.f32.gmra.mxu0 %v291
    %v451 = vpop.f32.mrf.mxu0
    %v452 = vadd.f32 0.0, %v451
    %v453 = vpop.f32.mrf.mxu0
    %454 = vdwg.mxu0
    %v455 = vadd.f32 %v384, %v452
    %v456 = vtanh.pop %v455
    %v457 = vxor.u32 %v455, 2147483648
    %v458 = vmul.f32 %v457, 1.442695
    %v459 = vpow.pop %v458
    %v460 = vadd.f32 %v459, 1.0
    %v461 = vrcp.pop %v460
    %v462 = vmul.f32 1.0, %v461
    %v463 = vsel %vm62, %v456, %v462
    %464 = vrot.lane.b32.xlu0 %v463, 96
    %v465 = vpop.permute.xlu0 %464
    %466 = vrot.lane.b32.xlu0 %v463, 64
    %v467 = vpop.permute.xlu0 %466
    %468 = vrot.lane.b32.xlu0 %v463, 32
    %v469 = vpop.permute.xlu0 %468
    %v470 = vmul.f32 %v465, %v289
    %v471 = vmul.f32 %v463, %v467
    %v472 = vadd.f32 %v470, %v471
    %v473 = vtanh.pop %v472
    %v474 = vmul.f32 %v469, %v473
    %475 = vrot.lane.b32.xlu0 %v383, 32
    %v476 = vpop.permute.xlu0 %475
    %v477 = vsel %vm63, %v474, %v476
    %478 = vmatprep.subr.mxu0 0.0
    %479 = vmatpush1.msra.mxu0 %v95
    %480 = vmatprep.subr.mxu0 0.0
    %481 = vmatpush1.msra.mxu0 %v94
    %482 = vmatprep.subr.mxu0 0.0
    %483 = vmatpush1.msra.mxu0 %v93
    %484 = vmatprep.subr.mxu0 0.0
    %485 = vmatpush1.msra.mxu0 %v92
    %486 = vmatprep.subr.mxu0 0.0
    %487 = vmatpush1.msra.mxu0 %v91
    %488 = vmatprep.subr.mxu0 0.0
    %489 = vmatpush1.msra.mxu0 %v90
    %490 = vmatprep.subr.mxu0 0.0
    %491 = vmatpush1.msra.mxu0 %v89
    %492 = vmatprep.subr.mxu0 0.0
    %493 = vmatpush1.msra.mxu0 %v88
    %494 = vmatprep.subr.mxu0 0.0
    %495 = vmatpush1.msra.mxu0 %v87
    %496 = vmatprep.subr.mxu0 0.0
    %497 = vmatpush1.msra.mxu0 %v86
    %498 = vmatprep.subr.mxu0 0.0
    %499 = vmatpush1.msra.mxu0 %v85
    %500 = vmatprep.subr.mxu0 0.0
    %501 = vmatpush1.msra.mxu0 %v84
    %502 = vmatprep.subr.mxu0 0.0
    %503 = vmatpush1.msra.mxu0 %v83
    %504 = vmatprep.subr.mxu0 0.0
    %505 = vmatpush1.msra.mxu0 %v82
    %506 = vmatprep.subr.mxu0 0.0
    %507 = vmatpush1.msra.mxu0 %v81
    %508 = vmatprep.subr.mxu0 0.0
    %509 = vmatpush1.msra.mxu0 %v80
    %510 = vmatprep.subr.mxu0 0.0
    %511 = vmatpush2.msra.mxu0 0.0
    %512 = vmatprep.subr.mxu0 0.0
    %513 = vmatpush2.msra.mxu0 0.0
    %514 = vmatprep.subr.mxu0 0.0
    %515 = vmatpush2.msra.mxu0 0.0
    %516 = vmatprep.subr.mxu0 0.0
    %517 = vmatpush2.msra.mxu0 0.0
    %518 = vmatprep.subr.mxu0 0.0
    %519 = vmatpush2.msra.mxu0 0.0
    %520 = vmatprep.subr.mxu0 0.0
    %521 = vmatpush2.msra.mxu0 0.0
    %522 = vmatprep.subr.mxu0 0.0
    %523 = vmatpush2.msra.mxu0 0.0
    %524 = vmatprep.subr.mxu0 0.0
    %525 = vmatpush2.msra.mxu0 0.0
    %526 = vmatprep.subr.mxu0 0.0
    %527 = vmatpush2.msra.mxu0 0.0
    %528 = vmatprep.subr.mxu0 0.0
    %529 = vmatpush2.msra.mxu0 0.0
    %530 = vmatprep.subr.mxu0 0.0
    %531 = vmatpush2.msra.mxu0 0.0
    %532 = vmatprep.subr.mxu0 0.0
    %533 = vmatpush2.msra.mxu0 0.0
    %534 = vmatprep.subr.mxu0 0.0
    %535 = vmatpush2.msra.mxu0 0.0
    %536 = vmatprep.subr.mxu0 0.0
    %537 = vmatpush2.msra.mxu0 0.0
    %538 = vmatprep.subr.mxu0 0.0
    %539 = vmatpush2.msra.mxu0 0.0
    %540 = vmatprep.subr.mxu0 0.0
    %541 = vmatpush2.msra.mxu0 0.0
    %542 = vmatprep.mubr.f32.mxu0 0.0
    %543 = vmatmul.mubr.f32.gmra.mxu0 %v477
    %v544 = vpop.f32.mrf.mxu0
    %v545 = vadd.f32 %v101, %v544
    %v546 = vpop.f32.mrf.mxu0
    %547 = vdwg.mxu0
    %v548 = vtanh.pop %v545
    %v549 = vxor.u32 %v545, 2147483648
    %v550 = vmul.f32 %v549, 1.442695
    %v551 = vpow.pop %v550
    %v552 = vadd.f32 %v551, 1.0
    %v553 = vrcp.pop %v552
    %v554 = vmul.f32 1.0, %v553
    %v555 = vsel %vm62, %v548, %v554
    %556 = vrot.lane.b32.xlu0 %v555, 96
    %v557 = vpop.permute.xlu0 %556
    %558 = vrot.lane.b32.xlu0 %v555, 64
    %v559 = vpop.permute.xlu0 %558
    %560 = vrot.lane.b32.xlu0 %v555, 32
    %v561 = vpop.permute.xlu0 %560
    %v562 = vmul.f32 %v557, %v381
    %v563 = vmul.f32 %v555, %v559
    %v564 = vadd.f32 %v562, %v563
    %v565 = vtanh.pop %v564
    %v566 = vmul.f32 %v561, %v565
    %v567 = vld [vmem:[#allocation2 + $0x4] sm:$0x3]
    %568 = vmatprep.subr.mxu0 0.0
    %569 = vmatpush1.msra.mxu0 %v79
    %570 = vmatprep.subr.mxu0 0.0
    %571 = vmatpush1.msra.mxu0 %v78
    %572 = vmatprep.subr.mxu0 0.0
    %573 = vmatpush1.msra.mxu0 %v77
    %574 = vmatprep.subr.mxu0 0.0
    %575 = vmatpush1.msra.mxu0 %v76
    %576 = vmatprep.subr.mxu0 0.0
    %577 = vmatpush1.msra.mxu0 %v75
    %578 = vmatprep.subr.mxu0 0.0
    %579 = vmatpush1.msra.mxu0 %v74
    %580 = vmatprep.subr.mxu0 0.0
    %581 = vmatpush1.msra.mxu0 %v73
    %582 = vmatprep.subr.mxu0 0.0
    %583 = vmatpush1.msra.mxu0 %v72
    %584 = vmatprep.subr.mxu0 0.0
    %585 = vmatpush1.msra.mxu0 %v71
    %586 = vmatprep.subr.mxu0 0.0
    %587 = vmatpush1.msra.mxu0 %v70
    %588 = vmatprep.subr.mxu0 0.0
    %589 = vmatpush1.msra.mxu0 %v69
    %590 = vmatprep.subr.mxu0 0.0
    %591 = vmatpush1.msra.mxu0 %v68
    %592 = vmatprep.subr.mxu0 0.0
    %593 = vmatpush1.msra.mxu0 %v67
    %594 = vmatprep.subr.mxu0 0.0
    %595 = vmatpush1.msra.mxu0 %v66
    %596 = vmatprep.subr.mxu0 0.0
    %597 = vmatpush1.msra.mxu0 %v65
    %598 = vmatprep.subr.mxu0 0.0
    %599 = vmatpush1.msra.mxu0 %v64
    %600 = vmatprep.subr.mxu0 0.0
    %601 = vmatpush2.msra.mxu0 0.0
    %602 = vmatprep.subr.mxu0 0.0
    %603 = vmatpush2.msra.mxu0 0.0
    %604 = vmatprep.subr.mxu0 0.0
    %605 = vmatpush2.msra.mxu0 0.0
    %606 = vmatprep.subr.mxu0 0.0
    %607 = vmatpush2.msra.mxu0 0.0
    %608 = vmatprep.subr.mxu0 0.0
    %609 = vmatpush2.msra.mxu0 0.0
    %610 = vmatprep.subr.mxu0 0.0
    %611 = vmatpush2.msra.mxu0 0.0
    %612 = vmatprep.subr.mxu0 0.0
    %613 = vmatpush2.msra.mxu0 0.0
    %614 = vmatprep.subr.mxu0 0.0
    %615 = vmatpush2.msra.mxu0 0.0
    %616 = vmatprep.subr.mxu0 0.0
    %617 = vmatpush2.msra.mxu0 0.0
    %618 = vmatprep.subr.mxu0 0.0
    %619 = vmatpush2.msra.mxu0 0.0
    %620 = vmatprep.subr.mxu0 0.0
    %621 = vmatpush2.msra.mxu0 0.0
    %622 = vmatprep.subr.mxu0 0.0
    %623 = vmatpush2.msra.mxu0 0.0
    %624 = vmatprep.subr.mxu0 0.0
    %625 = vmatpush2.msra.mxu0 0.0
    %626 = vmatprep.subr.mxu0 0.0
    %627 = vmatpush2.msra.mxu0 0.0
    %628 = vmatprep.subr.mxu0 0.0
    %629 = vmatpush2.msra.mxu0 0.0
    %630 = vmatprep.subr.mxu0 0.0
    %631 = vmatpush2.msra.mxu0 0.0
    %632 = vmatprep.mubr.f32.mxu0 0.0
    %633 = vmatmul.mubr.f32.gmra.mxu0 %v474
    %v634 = vpop.f32.mrf.mxu0
    %v635 = vadd.f32 0.0, %v634
    %v636 = vpop.f32.mrf.mxu0
    %637 = vdwg.mxu0
    %v638 = vadd.f32 %v567, %v635
    %v639 = vtanh.pop %v638
    %v640 = vxor.u32 %v638, 2147483648
    %v641 = vmul.f32 %v640, 1.442695
    %v642 = vpow.pop %v641
    %v643 = vadd.f32 %v642, 1.0
    %v644 = vrcp.pop %v643
    %v645 = vmul.f32 1.0, %v644
    %v646 = vsel %vm62, %v639, %v645
    %647 = vrot.lane.b32.xlu0 %v646, 96
    %v648 = vpop.permute.xlu0 %647
    %649 = vrot.lane.b32.xlu0 %v646, 64
    %v650 = vpop.permute.xlu0 %649
    %651 = vrot.lane.b32.xlu0 %v646, 32
    %v652 = vpop.permute.xlu0 %651
    %v653 = vmul.f32 %v648, %v472
    %v654 = vmul.f32 %v646, %v650
    %v655 = vadd.f32 %v653, %v654
    %v656 = vtanh.pop %v655
    %v657 = vmul.f32 %v652, %v656
    %658 = vrot.lane.b32.xlu0 %v566, 32
    %v659 = vpop.permute.xlu0 %658
    %v660 = vsel %vm63, %v657, %v659
    %661 = vmatprep.subr.mxu0 0.0
    %662 = vmatpush1.msra.mxu0 %v95
    %663 = vmatprep.subr.mxu0 0.0
    %664 = vmatpush1.msra.mxu0 %v94
    %665 = vmatprep.subr.mxu0 0.0
    %666 = vmatpush1.msra.mxu0 %v93
    %667 = vmatprep.subr.mxu0 0.0
    %668 = vmatpush1.msra.mxu0 %v92
    %669 = vmatprep.subr.mxu0 0.0
    %670 = vmatpush1.msra.mxu0 %v91
    %671 = vmatprep.subr.mxu0 0.0
    %672 = vmatpush1.msra.mxu0 %v90
    %673 = vmatprep.subr.mxu0 0.0
    %674 = vmatpush1.msra.mxu0 %v89
    %675 = vmatprep.subr.mxu0 0.0
    %676 = vmatpush1.msra.mxu0 %v88
    %677 = vmatprep.subr.mxu0 0.0
    %678 = vmatpush1.msra.mxu0 %v87
    %679 = vmatprep.subr.mxu0 0.0
    %680 = vmatpush1.msra.mxu0 %v86
    %681 = vmatprep.subr.mxu0 0.0
    %682 = vmatpush1.msra.mxu0 %v85
    %683 = vmatprep.subr.mxu0 0.0
    %684 = vmatpush1.msra.mxu0 %v84
    %685 = vmatprep.subr.mxu0 0.0
    %686 = vmatpush1.msra.mxu0 %v83
    %687 = vmatprep.subr.mxu0 0.0
    %688 = vmatpush1.msra.mxu0 %v82
    %689 = vmatprep.subr.mxu0 0.0
    %690 = vmatpush1.msra.mxu0 %v81
    %691 = vmatprep.subr.mxu0 0.0
    %692 = vmatpush1.msra.mxu0 %v80
    %693 = vmatprep.subr.mxu0 0.0
    %694 = vmatpush2.msra.mxu0 0.0
    %695 = vmatprep.subr.mxu0 0.0
    %696 = vmatpush2.msra.mxu0 0.0
    %697 = vmatprep.subr.mxu0 0.0
    %698 = vmatpush2.msra.mxu0 0.0
    %699 = vmatprep.subr.mxu0 0.0
    %700 = vmatpush2.msra.mxu0 0.0
    %701 = vmatprep.subr.mxu0 0.0
    %702 = vmatpush2.msra.mxu0 0.0
    %703 = vmatprep.subr.mxu0 0.0
    %704 = vmatpush2.msra.mxu0 0.0
    %705 = vmatprep.subr.mxu0 0.0
    %706 = vmatpush2.msra.mxu0 0.0
    %707 = vmatprep.subr.mxu0 0.0
    %708 = vmatpush2.msra.mxu0 0.0
    %709 = vmatprep.subr.mxu0 0.0
    %710 = vmatpush2.msra.mxu0 0.0
    %711 = vmatprep.subr.mxu0 0.0
    %712 = vmatpush2.msra.mxu0 0.0
    %713 = vmatprep.subr.mxu0 0.0
    %714 = vmatpush2.msra.mxu0 0.0
    %715 = vmatprep.subr.mxu0 0.0
    %716 = vmatpush2.msra.mxu0 0.0
    %717 = vmatprep.subr.mxu0 0.0
    %718 = vmatpush2.msra.mxu0 0.0
    %719 = vmatprep.subr.mxu0 0.0
    %720 = vmatpush2.msra.mxu0 0.0
    %721 = vmatprep.subr.mxu0 0.0
    %722 = vmatpush2.msra.mxu0 0.0
    %723 = vmatprep.subr.mxu0 0.0
    %724 = vmatpush2.msra.mxu0 0.0
    %725 = vmatprep.mubr.f32.mxu0 0.0
    %726 = vmatmul.mubr.f32.gmra.mxu0 %v660
    %v727 = vpop.f32.mrf.mxu0
    %v728 = vadd.f32 %v101, %v727
    %v729 = vpop.f32.mrf.mxu0
    %730 = vdwg.mxu0
    %v731 = vtanh.pop %v728
    %v732 = vxor.u32 %v728, 2147483648
    %v733 = vmul.f32 %v732, 1.442695
    %v734 = vpow.pop %v733
    %v735 = vadd.f32 %v734, 1.0
    %v736 = vrcp.pop %v735
    %v737 = vmul.f32 1.0, %v736
    %v738 = vsel %vm62, %v731, %v737
    %739 = vrot.lane.b32.xlu0 %v738, 96
    %v740 = vpop.permute.xlu0 %739
    %741 = vrot.lane.b32.xlu0 %v738, 64
    %v742 = vpop.permute.xlu0 %741
    %743 = vrot.lane.b32.xlu0 %v738, 32
    %v744 = vpop.permute.xlu0 %743
    %v745 = vmul.f32 %v740, %v564
    %v746 = vmul.f32 %v738, %v742
    %v747 = vadd.f32 %v745, %v746
    %v748 = vtanh.pop %v747
    %v749 = vmul.f32 %v744, %v748
    %v750 = vld [vmem:[#allocation2 + $0x6] sm:$0x3]
    %751 = vmatprep.subr.mxu0 0.0
    %752 = vmatpush1.msra.mxu0 %v79
    %753 = vmatprep.subr.mxu0 0.0
    %754 = vmatpush1.msra.mxu0 %v78
    %755 = vmatprep.subr.mxu0 0.0
    %756 = vmatpush1.msra.mxu0 %v77
    %757 = vmatprep.subr.mxu0 0.0
    %758 = vmatpush1.msra.mxu0 %v76
    %759 = vmatprep.subr.mxu0 0.0
    %760 = vmatpush1.msra.mxu0 %v75
    %761 = vmatprep.subr.mxu0 0.0
    %762 = vmatpush1.msra.mxu0 %v74
    %763 = vmatprep.subr.mxu0 0.0
    %764 = vmatpush1.msra.mxu0 %v73
    %765 = vmatprep.subr.mxu0 0.0
    %766 = vmatpush1.msra.mxu0 %v72
    %767 = vmatprep.subr.mxu0 0.0
    %768 = vmatpush1.msra.mxu0 %v71
    %769 = vmatprep.subr.mxu0 0.0
    %770 = vmatpush1.msra.mxu0 %v70
    %771 = vmatprep.subr.mxu0 0.0
    %772 = vmatpush1.msra.mxu0 %v69
    %773 = vmatprep.subr.mxu0 0.0
    %774 = vmatpush1.msra.mxu0 %v68
    %775 = vmatprep.subr.mxu0 0.0
    %776 = vmatpush1.msra.mxu0 %v67
    %777 = vmatprep.subr.mxu0 0.0
    %778 = vmatpush1.msra.mxu0 %v66
    %779 = vmatprep.subr.mxu0 0.0
    %780 = vmatpush1.msra.mxu0 %v65
    %781 = vmatprep.subr.mxu0 0.0
    %782 = vmatpush1.msra.mxu0 %v64
    %783 = vmatprep.subr.mxu0 0.0
    %784 = vmatpush2.msra.mxu0 0.0
    %785 = vmatprep.subr.mxu0 0.0
    %786 = vmatpush2.msra.mxu0 0.0
    %787 = vmatprep.subr.mxu0 0.0
    %788 = vmatpush2.msra.mxu0 0.0
    %789 = vmatprep.subr.mxu0 0.0
    %790 = vmatpush2.msra.mxu0 0.0
    %791 = vmatprep.subr.mxu0 0.0
    %792 = vmatpush2.msra.mxu0 0.0
    %793 = vmatprep.subr.mxu0 0.0
    %794 = vmatpush2.msra.mxu0 0.0
    %795 = vmatprep.subr.mxu0 0.0
    %796 = vmatpush2.msra.mxu0 0.0
    %797 = vmatprep.subr.mxu0 0.0
    %798 = vmatpush2.msra.mxu0 0.0
    %799 = vmatprep.subr.mxu0 0.0
    %800 = vmatpush2.msra.mxu0 0.0
    %801 = vmatprep.subr.mxu0 0.0
    %802 = vmatpush2.msra.mxu0 0.0
    %803 = vmatprep.subr.mxu0 0.0
    %804 = vmatpush2.msra.mxu0 0.0
    %805 = vmatprep.subr.mxu0 0.0
    %806 = vmatpush2.msra.mxu0 0.0
    %807 = vmatprep.subr.mxu0 0.0
    %808 = vmatpush2.msra.mxu0 0.0
    %809 = vmatprep.subr.mxu0 0.0
    %810 = vmatpush2.msra.mxu0 0.0
    %811 = vmatprep.subr.mxu0 0.0
    %812 = vmatpush2.msra.mxu0 0.0
    %813 = vmatprep.subr.mxu0 0.0
    %814 = vmatpush2.msra.mxu0 0.0
    %815 = vmatprep.mubr.f32.mxu0 0.0
    %816 = vmatmul.mubr.f32.gmra.mxu0 %v657
    %v817 = vpop.f32.mrf.mxu0
    %v818 = vadd.f32 0.0, %v817
    %v819 = vpop.f32.mrf.mxu0
    %820 = vdwg.mxu0
    %v821 = vadd.f32 %v750, %v818
    %v822 = vtanh.pop %v821
    %v823 = vxor.u32 %v821, 2147483648
    %v824 = vmul.f32 %v823, 1.442695
    %v825 = vpow.pop %v824
    %v826 = vadd.f32 %v825, 1.0
    %v827 = vrcp.pop %v826
    %v828 = vmul.f32 1.0, %v827
    %v829 = vsel %vm62, %v822, %v828
    %830 = vrot.lane.b32.xlu0 %v829, 96
    %v831 = vpop.permute.xlu0 %830
    %832 = vrot.lane.b32.xlu0 %v829, 64
    %v833 = vpop.permute.xlu0 %832
    %834 = vrot.lane.b32.xlu0 %v829, 32
    %v835 = vpop.permute.xlu0 %834
    %v836 = vmul.f32 %v831, %v655
    %v837 = vmul.f32 %v829, %v833
    %v838 = vadd.f32 %v836, %v837
    %v839 = vtanh.pop %v838
    %v840 = vmul.f32 %v835, %v839
    %841 = vrot.lane.b32.xlu0 %v749, 32
    %v842 = vpop.permute.xlu0 %841
    %v843 = vsel %vm63, %v840, %v842
    %844 = vmatprep.subr.mxu0 0.0
    %845 = vmatpush1.msra.mxu0 %v95
    %846 = vmatprep.subr.mxu0 0.0
    %847 = vmatpush1.msra.mxu0 %v94
    %848 = vmatprep.subr.mxu0 0.0
    %849 = vmatpush1.msra.mxu0 %v93
    %850 = vmatprep.subr.mxu0 0.0
    %851 = vmatpush1.msra.mxu0 %v92
    %852 = vmatprep.subr.mxu0 0.0
    %853 = vmatpush1.msra.mxu0 %v91
    %854 = vmatprep.subr.mxu0 0.0
    %855 = vmatpush1.msra.mxu0 %v90
    %856 = vmatprep.subr.mxu0 0.0
    %857 = vmatpush1.msra.mxu0 %v89
    %858 = vmatprep.subr.mxu0 0.0
    %859 = vmatpush1.msra.mxu0 %v88
    %860 = vmatprep.subr.mxu0 0.0
    %861 = vmatpush1.msra.mxu0 %v87
    %862 = vmatprep.subr.mxu0 0.0
    %863 = vmatpush1.msra.mxu0 %v86
    %864 = vmatprep.subr.mxu0 0.0
    %865 = vmatpush1.msra.mxu0 %v85
    %866 = vmatprep.subr.mxu0 0.0
    %867 = vmatpush1.msra.mxu0 %v84
    %868 = vmatprep.subr.mxu0 0.0
    %869 = vmatpush1.msra.mxu0 %v83
    %870 = vmatprep.subr.mxu0 0.0
    %871 = vmatpush1.msra.mxu0 %v82
    %872 = vmatprep.subr.mxu0 0.0
    %873 = vmatpush1.msra.mxu0 %v81
    %874 = vmatprep.subr.mxu0 0.0
    %875 = vmatpush1.msra.mxu0 %v80
    %876 = vmatprep.subr.mxu0 0.0
    %877 = vmatpush2.msra.mxu0 0.0
    %878 = vmatprep.subr.mxu0 0.0
    %879 = vmatpush2.msra.mxu0 0.0
    %880 = vmatprep.subr.mxu0 0.0
    %881 = vmatpush2.msra.mxu0 0.0
    %882 = vmatprep.subr.mxu0 0.0
    %883 = vmatpush2.msra.mxu0 0.0
    %884 = vmatprep.subr.mxu0 0.0
    %885 = vmatpush2.msra.mxu0 0.0
    %886 = vmatprep.subr.mxu0 0.0
    %887 = vmatpush2.msra.mxu0 0.0
    %888 = vmatprep.subr.mxu0 0.0
    %889 = vmatpush2.msra.mxu0 0.0
    %890 = vmatprep.subr.mxu0 0.0
    %891 = vmatpush2.msra.mxu0 0.0
    %892 = vmatprep.subr.mxu0 0.0
    %893 = vmatpush2.msra.mxu0 0.0
    %894 = vmatprep.subr.mxu0 0.0
    %895 = vmatpush2.msra.mxu0 0.0
    %896 = vmatprep.subr.mxu0 0.0
    %897 = vmatpush2.msra.mxu0 0.0
    %898 = vmatprep.subr.mxu0 0.0
    %899 = vmatpush2.msra.mxu0 0.0
    %900 = vmatprep.subr.mxu0 0.0
    %901 = vmatpush2.msra.mxu0 0.0
    %902 = vmatprep.subr.mxu0 0.0
    %903 = vmatpush2.msra.mxu0 0.0
    %904 = vmatprep.subr.mxu0 0.0
    %905 = vmatpush2.msra.mxu0 0.0
    %906 = vmatprep.subr.mxu0 0.0
    %907 = vmatpush2.msra.mxu0 0.0
    %908 = vmatprep.mubr.f32.mxu0 0.0
    %909 = vmatmul.mubr.f32.gmra.mxu0 %v843
    %v910 = vpop.f32.mrf.mxu0
    %v911 = vadd.f32 %v101, %v910
    %v912 = vpop.f32.mrf.mxu0
    %913 = vdwg.mxu0
    %v914 = vtanh.pop %v911
    %v915 = vxor.u32 %v911, 2147483648
    %v916 = vmul.f32 %v915, 1.442695
    %v917 = vpow.pop %v916
    %v918 = vadd.f32 %v917, 1.0
    %v919 = vrcp.pop %v918
    %v920 = vmul.f32 1.0, %v919
    %v921 = vsel %vm62, %v914, %v920
    %922 = vrot.lane.b32.xlu0 %v921, 96
    %v923 = vpop.permute.xlu0 %922
    %924 = vrot.lane.b32.xlu0 %v921, 64
    %v925 = vpop.permute.xlu0 %924
    %926 = vrot.lane.b32.xlu0 %v921, 32
    %v927 = vpop.permute.xlu0 %926
    %v928 = vmul.f32 %v923, %v747
    %v929 = vmul.f32 %v921, %v925
    %v930 = vadd.f32 %v928, %v929
    %v931 = vtanh.pop %v930
    %v932 = vmul.f32 %v927, %v931
    %v933 = vld [vmem:[#allocation2 + $0x8] sm:$0x3]
    %934 = vmatprep.subr.mxu0 0.0
    %935 = vmatpush1.msra.mxu0 %v79
    %936 = vmatprep.subr.mxu0 0.0
    %937 = vmatpush1.msra.mxu0 %v78
    %938 = vmatprep.subr.mxu0 0.0
    %939 = vmatpush1.msra.mxu0 %v77
    %940 = vmatprep.subr.mxu0 0.0
    %941 = vmatpush1.msra.mxu0 %v76
    %942 = vmatprep.subr.mxu0 0.0
    %943 = vmatpush1.msra.mxu0 %v75
    %944 = vmatprep.subr.mxu0 0.0
    %945 = vmatpush1.msra.mxu0 %v74
    %946 = vmatprep.subr.mxu0 0.0
    %947 = vmatpush1.msra.mxu0 %v73
    %948 = vmatprep.subr.mxu0 0.0
    %949 = vmatpush1.msra.mxu0 %v72
    %950 = vmatprep.subr.mxu0 0.0
    %951 = vmatpush1.msra.mxu0 %v71
    %952 = vmatprep.subr.mxu0 0.0
    %953 = vmatpush1.msra.mxu0 %v70
    %954 = vmatprep.subr.mxu0 0.0
    %955 = vmatpush1.msra.mxu0 %v69
    %956 = vmatprep.subr.mxu0 0.0
    %957 = vmatpush1.msra.mxu0 %v68
    %958 = vmatprep.subr.mxu0 0.0
    %959 = vmatpush1.msra.mxu0 %v67
    %960 = vmatprep.subr.mxu0 0.0
    %961 = vmatpush1.msra.mxu0 %v66
    %962 = vmatprep.subr.mxu0 0.0
    %963 = vmatpush1.msra.mxu0 %v65
    %964 = vmatprep.subr.mxu0 0.0
    %965 = vmatpush1.msra.mxu0 %v64
    %966 = vmatprep.subr.mxu0 0.0
    %967 = vmatpush2.msra.mxu0 0.0
    %968 = vmatprep.subr.mxu0 0.0
    %969 = vmatpush2.msra.mxu0 0.0
    %970 = vmatprep.subr.mxu0 0.0
    %971 = vmatpush2.msra.mxu0 0.0
    %972 = vmatprep.subr.mxu0 0.0
    %973 = vmatpush2.msra.mxu0 0.0
    %974 = vmatprep.subr.mxu0 0.0
    %975 = vmatpush2.msra.mxu0 0.0
    %976 = vmatprep.subr.mxu0 0.0
    %977 = vmatpush2.msra.mxu0 0.0
    %978 = vmatprep.subr.mxu0 0.0
    %979 = vmatpush2.msra.mxu0 0.0
    %980 = vmatprep.subr.mxu0 0.0
    %981 = vmatpush2.msra.mxu0 0.0
    %982 = vmatprep.subr.mxu0 0.0
    %983 = vmatpush2.msra.mxu0 0.0
    %984 = vmatprep.subr.mxu0 0.0
    %985 = vmatpush2.msra.mxu0 0.0
    %986 = vmatprep.subr.mxu0 0.0
    %987 = vmatpush2.msra.mxu0 0.0
    %988 = vmatprep.subr.mxu0 0.0
    %989 = vmatpush2.msra.mxu0 0.0
    %990 = vmatprep.subr.mxu0 0.0
    %991 = vmatpush2.msra.mxu0 0.0
    %992 = vmatprep.subr.mxu0 0.0
    %993 = vmatpush2.msra.mxu0 0.0
    %994 = vmatprep.subr.mxu0 0.0
    %995 = vmatpush2.msra.mxu0 0.0
    %996 = vmatprep.subr.mxu0 0.0
    %997 = vmatpush2.msra.mxu0 0.0
    %998 = vmatprep.mubr.f32.mxu0 0.0
    %999 = vmatmul.mubr.f32.gmra.mxu0 %v840
    %v1000 = vpop.f32.mrf.mxu0
    %v1001 = vadd.f32 0.0, %v1000
    %v1002 = vpop.f32.mrf.mxu0
    %1003 = vdwg.mxu0
    %v1004 = vadd.f32 %v933, %v1001
    %v1005 = vtanh.pop %v1004
    %v1006 = vxor.u32 %v1004, 2147483648
    %v1007 = vmul.f32 %v1006, 1.442695
    %v1008 = vpow.pop %v1007
    %v1009 = vadd.f32 %v1008, 1.0
    %v1010 = vrcp.pop %v1009
    %v1011 = vmul.f32 1.0, %v1010
    %v1012 = vsel %vm62, %v1005, %v1011
    %1013 = vrot.lane.b32.xlu0 %v1012, 96
    %v1014 = vpop.permute.xlu0 %1013
    %1015 = vrot.lane.b32.xlu0 %v1012, 64
    %v1016 = vpop.permute.xlu0 %1015
    %1017 = vrot.lane.b32.xlu0 %v1012, 32
    %v1018 = vpop.permute.xlu0 %1017
    %v1019 = vmul.f32 %v1014, %v838
    %v1020 = vmul.f32 %v1012, %v1016
    %v1021 = vadd.f32 %v1019, %v1020
    %v1022 = vtanh.pop %v1021
    %v1023 = vmul.f32 %v1018, %v1022
    %1024 = vrot.lane.b32.xlu0 %v932, 32
    %v1025 = vpop.permute.xlu0 %1024
    %v1026 = vsel %vm63, %v1023, %v1025
    %1027 = vmatprep.subr.mxu0 0.0
    %1028 = vmatpush1.msra.mxu0 %v95
    %1029 = vmatprep.subr.mxu0 0.0
    %1030 = vmatpush1.msra.mxu0 %v94
    %1031 = vmatprep.subr.mxu0 0.0
    %1032 = vmatpush1.msra.mxu0 %v93
    %1033 = vmatprep.subr.mxu0 0.0
    %1034 = vmatpush1.msra.mxu0 %v92
    %1035 = vmatprep.subr.mxu0 0.0
    %1036 = vmatpush1.msra.mxu0 %v91
    %1037 = vmatprep.subr.mxu0 0.0
    %1038 = vmatpush1.msra.mxu0 %v90
    %1039 = vmatprep.subr.mxu0 0.0
    %1040 = vmatpush1.msra.mxu0 %v89
    %1041 = vmatprep.subr.mxu0 0.0
    %1042 = vmatpush1.msra.mxu0 %v88
    %1043 = vmatprep.subr.mxu0 0.0
    %1044 = vmatpush1.msra.mxu0 %v87
    %1045 = vmatprep.subr.mxu0 0.0
    %1046 = vmatpush1.msra.mxu0 %v86
    %1047 = vmatprep.subr.mxu0 0.0
    %1048 = vmatpush1.msra.mxu0 %v85
    %1049 = vmatprep.subr.mxu0 0.0
    %1050 = vmatpush1.msra.mxu0 %v84
    %1051 = vmatprep.subr.mxu0 0.0
    %1052 = vmatpush1.msra.mxu0 %v83
    %1053 = vmatprep.subr.mxu0 0.0
    %1054 = vmatpush1.msra.mxu0 %v82
    %1055 = vmatprep.subr.mxu0 0.0
    %1056 = vmatpush1.msra.mxu0 %v81
    %1057 = vmatprep.subr.mxu0 0.0
    %1058 = vmatpush1.msra.mxu0 %v80
    %1059 = vmatprep.subr.mxu0 0.0
    %1060 = vmatpush2.msra.mxu0 0.0
    %1061 = vmatprep.subr.mxu0 0.0
    %1062 = vmatpush2.msra.mxu0 0.0
    %1063 = vmatprep.subr.mxu0 0.0
    %1064 = vmatpush2.msra.mxu0 0.0
    %1065 = vmatprep.subr.mxu0 0.0
    %1066 = vmatpush2.msra.mxu0 0.0
    %1067 = vmatprep.subr.mxu0 0.0
    %1068 = vmatpush2.msra.mxu0 0.0
    %1069 = vmatprep.subr.mxu0 0.0
    %1070 = vmatpush2.msra.mxu0 0.0
    %1071 = vmatprep.subr.mxu0 0.0
    %1072 = vmatpush2.msra.mxu0 0.0
    %1073 = vmatprep.subr.mxu0 0.0
    %1074 = vmatpush2.msra.mxu0 0.0
    %1075 = vmatprep.subr.mxu0 0.0
    %1076 = vmatpush2.msra.mxu0 0.0
    %1077 = vmatprep.subr.mxu0 0.0
    %1078 = vmatpush2.msra.mxu0 0.0
    %1079 = vmatprep.subr.mxu0 0.0
    %1080 = vmatpush2.msra.mxu0 0.0
    %1081 = vmatprep.subr.mxu0 0.0
    %1082 = vmatpush2.msra.mxu0 0.0
    %1083 = vmatprep.subr.mxu0 0.0
    %1084 = vmatpush2.msra.mxu0 0.0
    %1085 = vmatprep.subr.mxu0 0.0
    %1086 = vmatpush2.msra.mxu0 0.0
    %1087 = vmatprep.subr.mxu0 0.0
    %1088 = vmatpush2.msra.mxu0 0.0
    %1089 = vmatprep.subr.mxu0 0.0
    %1090 = vmatpush2.msra.mxu0 0.0
    %1091 = vmatprep.mubr.f32.mxu0 0.0
    %1092 = vmatmul.mubr.f32.gmra.mxu0 %v1026
    %v1093 = vpop.f32.mrf.mxu0
    %v1094 = vadd.f32 %v101, %v1093
    %v1095 = vpop.f32.mrf.mxu0
    %1096 = vdwg.mxu0
    %v1097 = vtanh.pop %v1094
    %v1098 = vxor.u32 %v1094, 2147483648
    %v1099 = vmul.f32 %v1098, 1.442695
    %v1100 = vpow.pop %v1099
    %v1101 = vadd.f32 %v1100, 1.0
    %v1102 = vrcp.pop %v1101
    %v1103 = vmul.f32 1.0, %v1102
    %v1104 = vsel %vm62, %v1097, %v1103
    %1105 = vrot.lane.b32.xlu0 %v1104, 96
    %v1106 = vpop.permute.xlu0 %1105
    %1107 = vrot.lane.b32.xlu0 %v1104, 64
    %v1108 = vpop.permute.xlu0 %1107
    %1109 = vrot.lane.b32.xlu0 %v1104, 32
    %v1110 = vpop.permute.xlu0 %1109
    %v1111 = vmul.f32 %v1106, %v930
    %v1112 = vmul.f32 %v1104, %v1108
    %v1113 = vadd.f32 %v1111, %v1112
    %v1114 = vtanh.pop %v1113
    %v1115 = vmul.f32 %v1110, %v1114
    %v1116 = vld [vmem:[#allocation2 + $0xa] sm:$0x3]
    %1117 = vmatprep.subr.mxu0 0.0
    %1118 = vmatpush1.msra.mxu0 %v79
    %1119 = vmatprep.subr.mxu0 0.0
    %1120 = vmatpush1.msra.mxu0 %v78
    %1121 = vmatprep.subr.mxu0 0.0
    %1122 = vmatpush1.msra.mxu0 %v77
    %1123 = vmatprep.subr.mxu0 0.0
    %1124 = vmatpush1.msra.mxu0 %v76
    %1125 = vmatprep.subr.mxu0 0.0
    %1126 = vmatpush1.msra.mxu0 %v75
    %1127 = vmatprep.subr.mxu0 0.0
    %1128 = vmatpush1.msra.mxu0 %v74
    %1129 = vmatprep.subr.mxu0 0.0
    %1130 = vmatpush1.msra.mxu0 %v73
    %1131 = vmatprep.subr.mxu0 0.0
    %1132 = vmatpush1.msra.mxu0 %v72
    %1133 = vmatprep.subr.mxu0 0.0
    %1134 = vmatpush1.msra.mxu0 %v71
    %1135 = vmatprep.subr.mxu0 0.0
    %1136 = vmatpush1.msra.mxu0 %v70
    %1137 = vmatprep.subr.mxu0 0.0
    %1138 = vmatpush1.msra.mxu0 %v69
    %1139 = vmatprep.subr.mxu0 0.0
    %1140 = vmatpush1.msra.mxu0 %v68
    %1141 = vmatprep.subr.mxu0 0.0
    %1142 = vmatpush1.msra.mxu0 %v67
    %1143 = vmatprep.subr.mxu0 0.0
    %1144 = vmatpush1.msra.mxu0 %v66
    %1145 = vmatprep.subr.mxu0 0.0
    %1146 = vmatpush1.msra.mxu0 %v65
    %1147 = vmatprep.subr.mxu0 0.0
    %1148 = vmatpush1.msra.mxu0 %v64
    %1149 = vmatprep.subr.mxu0 0.0
    %1150 = vmatpush2.msra.mxu0 0.0
    %1151 = vmatprep.subr.mxu0 0.0
    %1152 = vmatpush2.msra.mxu0 0.0
    %1153 = vmatprep.subr.mxu0 0.0
    %1154 = vmatpush2.msra.mxu0 0.0
    %1155 = vmatprep.subr.mxu0 0.0
    %1156 = vmatpush2.msra.mxu0 0.0
    %1157 = vmatprep.subr.mxu0 0.0
    %1158 = vmatpush2.msra.mxu0 0.0
    %1159 = vmatprep.subr.mxu0 0.0
    %1160 = vmatpush2.msra.mxu0 0.0
    %1161 = vmatprep.subr.mxu0 0.0
    %1162 = vmatpush2.msra.mxu0 0.0
    %1163 = vmatprep.subr.mxu0 0.0
    %1164 = vmatpush2.msra.mxu0 0.0
    %1165 = vmatprep.subr.mxu0 0.0
    %1166 = vmatpush2.msra.mxu0 0.0
    %1167 = vmatprep.subr.mxu0 0.0
    %1168 = vmatpush2.msra.mxu0 0.0
    %1169 = vmatprep.subr.mxu0 0.0
    %1170 = vmatpush2.msra.mxu0 0.0
    %1171 = vmatprep.subr.mxu0 0.0
    %1172 = vmatpush2.msra.mxu0 0.0
    %1173 = vmatprep.subr.mxu0 0.0
    %1174 = vmatpush2.msra.mxu0 0.0
    %1175 = vmatprep.subr.mxu0 0.0
    %1176 = vmatpush2.msra.mxu0 0.0
    %1177 = vmatprep.subr.mxu0 0.0
    %1178 = vmatpush2.msra.mxu0 0.0
    %1179 = vmatprep.subr.mxu0 0.0
    %1180 = vmatpush2.msra.mxu0 0.0
    %1181 = vmatprep.mubr.f32.mxu0 0.0
    %1182 = vmatmul.mubr.f32.gmra.mxu0 %v1023
    %v1183 = vpop.f32.mrf.mxu0
    %v1184 = vadd.f32 0.0, %v1183
    %v1185 = vpop.f32.mrf.mxu0
    %1186 = vdwg.mxu0
    %v1187 = vadd.f32 %v1116, %v1184
    %v1188 = vtanh.pop %v1187
    %v1189 = vxor.u32 %v1187, 2147483648
    %v1190 = vmul.f32 %v1189, 1.442695
    %v1191 = vpow.pop %v1190
    %v1192 = vadd.f32 %v1191, 1.0
    %v1193 = vrcp.pop %v1192
    %v1194 = vmul.f32 1.0, %v1193
    %v1195 = vsel %vm62, %v1188, %v1194
    %1196 = vrot.lane.b32.xlu0 %v1195, 96
    %v1197 = vpop.permute.xlu0 %1196
    %1198 = vrot.lane.b32.xlu0 %v1195, 64
    %v1199 = vpop.permute.xlu0 %1198
    %1200 = vrot.lane.b32.xlu0 %v1195, 32
    %v1201 = vpop.permute.xlu0 %1200
    %v1202 = vmul.f32 %v1197, %v1021
    %v1203 = vmul.f32 %v1195, %v1199
    %v1204 = vadd.f32 %v1202, %v1203
    %v1205 = vtanh.pop %v1204
    %v1206 = vmul.f32 %v1201, %v1205
    %1207 = vrot.lane.b32.xlu0 %v1115, 32
    %v1208 = vpop.permute.xlu0 %1207
    %v1209 = vsel %vm63, %v1206, %v1208
    %1210 = vmatprep.subr.mxu0 0.0
    %1211 = vmatpush1.msra.mxu0 %v95
    %1212 = vmatprep.subr.mxu0 0.0
    %1213 = vmatpush1.msra.mxu0 %v94
    %1214 = vmatprep.subr.mxu0 0.0
    %1215 = vmatpush1.msra.mxu0 %v93
    %1216 = vmatprep.subr.mxu0 0.0
    %1217 = vmatpush1.msra.mxu0 %v92
    %1218 = vmatprep.subr.mxu0 0.0
    %1219 = vmatpush1.msra.mxu0 %v91
    %1220 = vmatprep.subr.mxu0 0.0
    %1221 = vmatpush1.msra.mxu0 %v90
    %1222 = vmatprep.subr.mxu0 0.0
    %1223 = vmatpush1.msra.mxu0 %v89
    %1224 = vmatprep.subr.mxu0 0.0
    %1225 = vmatpush1.msra.mxu0 %v88
    %1226 = vmatprep.subr.mxu0 0.0
    %1227 = vmatpush1.msra.mxu0 %v87
    %1228 = vmatprep.subr.mxu0 0.0
    %1229 = vmatpush1.msra.mxu0 %v86
    %1230 = vmatprep.subr.mxu0 0.0
    %1231 = vmatpush1.msra.mxu0 %v85
    %1232 = vmatprep.subr.mxu0 0.0
    %1233 = vmatpush1.msra.mxu0 %v84
    %1234 = vmatprep.subr.mxu0 0.0
    %1235 = vmatpush1.msra.mxu0 %v83
    %1236 = vmatprep.subr.mxu0 0.0
    %1237 = vmatpush1.msra.mxu0 %v82
    %1238 = vmatprep.subr.mxu0 0.0
    %1239 = vmatpush1.msra.mxu0 %v81
    %1240 = vmatprep.subr.mxu0 0.0
    %1241 = vmatpush1.msra.mxu0 %v80
    %1242 = vmatprep.subr.mxu0 0.0
    %1243 = vmatpush2.msra.mxu0 0.0
    %1244 = vmatprep.subr.mxu0 0.0
    %1245 = vmatpush2.msra.mxu0 0.0
    %1246 = vmatprep.subr.mxu0 0.0
    %1247 = vmatpush2.msra.mxu0 0.0
    %1248 = vmatprep.subr.mxu0 0.0
    %1249 = vmatpush2.msra.mxu0 0.0
    %1250 = vmatprep.subr.mxu0 0.0
    %1251 = vmatpush2.msra.mxu0 0.0
    %1252 = vmatprep.subr.mxu0 0.0
    %1253 = vmatpush2.msra.mxu0 0.0
    %1254 = vmatprep.subr.mxu0 0.0
    %1255 = vmatpush2.msra.mxu0 0.0
    %1256 = vmatprep.subr.mxu0 0.0
    %1257 = vmatpush2.msra.mxu0 0.0
    %1258 = vmatprep.subr.mxu0 0.0
    %1259 = vmatpush2.msra.mxu0 0.0
    %1260 = vmatprep.subr.mxu0 0.0
    %1261 = vmatpush2.msra.mxu0 0.0
    %1262 = vmatprep.subr.mxu0 0.0
    %1263 = vmatpush2.msra.mxu0 0.0
    %1264 = vmatprep.subr.mxu0 0.0
    %1265 = vmatpush2.msra.mxu0 0.0
    %1266 = vmatprep.subr.mxu0 0.0
    %1267 = vmatpush2.msra.mxu0 0.0
    %1268 = vmatprep.subr.mxu0 0.0
    %1269 = vmatpush2.msra.mxu0 0.0
    %1270 = vmatprep.subr.mxu0 0.0
    %1271 = vmatpush2.msra.mxu0 0.0
    %1272 = vmatprep.subr.mxu0 0.0
    %1273 = vmatpush2.msra.mxu0 0.0
    %1274 = vmatprep.mubr.f32.mxu0 0.0
    %1275 = vmatmul.mubr.f32.gmra.mxu0 %v1209
    %v1276 = vpop.f32.mrf.mxu0
    %v1277 = vadd.f32 %v101, %v1276
    %v1278 = vpop.f32.mrf.mxu0
    %1279 = vdwg.mxu0
    %v1280 = vtanh.pop %v1277
    %v1281 = vxor.u32 %v1277, 2147483648
    %v1282 = vmul.f32 %v1281, 1.442695
    %v1283 = vpow.pop %v1282
    %v1284 = vadd.f32 %v1283, 1.0
    %v1285 = vrcp.pop %v1284
    %v1286 = vmul.f32 1.0, %v1285
    %v1287 = vsel %vm62, %v1280, %v1286
    %1288 = vrot.lane.b32.xlu0 %v1287, 96
    %v1289 = vpop.permute.xlu0 %1288
    %1290 = vrot.lane.b32.xlu0 %v1287, 64
    %v1291 = vpop.permute.xlu0 %1290
    %1292 = vrot.lane.b32.xlu0 %v1287, 32
    %v1293 = vpop.permute.xlu0 %1292
    %v1294 = vmul.f32 %v1289, %v1113
    %v1295 = vmul.f32 %v1287, %v1291
    %v1296 = vadd.f32 %v1294, %v1295
    %v1297 = vtanh.pop %v1296
    %v1298 = vmul.f32 %v1293, %v1297
    %v1299 = vld [vmem:[#allocation2 + $0xc] sm:$0x3]
    %1300 = vmatprep.subr.mxu0 0.0
    %1301 = vmatpush1.msra.mxu0 %v79
    %1302 = vmatprep.subr.mxu0 0.0
    %1303 = vmatpush1.msra.mxu0 %v78
    %1304 = vmatprep.subr.mxu0 0.0
    %1305 = vmatpush1.msra.mxu0 %v77
    %1306 = vmatprep.subr.mxu0 0.0
    %1307 = vmatpush1.msra.mxu0 %v76
    %1308 = vmatprep.subr.mxu0 0.0
    %1309 = vmatpush1.msra.mxu0 %v75
    %1310 = vmatprep.subr.mxu0 0.0
    %1311 = vmatpush1.msra.mxu0 %v74
    %1312 = vmatprep.subr.mxu0 0.0
    %1313 = vmatpush1.msra.mxu0 %v73
    %1314 = vmatprep.subr.mxu0 0.0
    %1315 = vmatpush1.msra.mxu0 %v72
    %1316 = vmatprep.subr.mxu0 0.0
    %1317 = vmatpush1.msra.mxu0 %v71
    %1318 = vmatprep.subr.mxu0 0.0
    %1319 = vmatpush1.msra.mxu0 %v70
    %1320 = vmatprep.subr.mxu0 0.0
    %1321 = vmatpush1.msra.mxu0 %v69
    %1322 = vmatprep.subr.mxu0 0.0
    %1323 = vmatpush1.msra.mxu0 %v68
    %1324 = vmatprep.subr.mxu0 0.0
    %1325 = vmatpush1.msra.mxu0 %v67
    %1326 = vmatprep.subr.mxu0 0.0
    %1327 = vmatpush1.msra.mxu0 %v66
    %1328 = vmatprep.subr.mxu0 0.0
    %1329 = vmatpush1.msra.mxu0 %v65
    %1330 = vmatprep.subr.mxu0 0.0
    %1331 = vmatpush1.msra.mxu0 %v64
    %1332 = vmatprep.subr.mxu0 0.0
    %1333 = vmatpush2.msra.mxu0 0.0
    %1334 = vmatprep.subr.mxu0 0.0
    %1335 = vmatpush2.msra.mxu0 0.0
    %1336 = vmatprep.subr.mxu0 0.0
    %1337 = vmatpush2.msra.mxu0 0.0
    %1338 = vmatprep.subr.mxu0 0.0
    %1339 = vmatpush2.msra.mxu0 0.0
    %1340 = vmatprep.subr.mxu0 0.0
    %1341 = vmatpush2.msra.mxu0 0.0
    %1342 = vmatprep.subr.mxu0 0.0
    %1343 = vmatpush2.msra.mxu0 0.0
    %1344 = vmatprep.subr.mxu0 0.0
    %1345 = vmatpush2.msra.mxu0 0.0
    %1346 = vmatprep.subr.mxu0 0.0
    %1347 = vmatpush2.msra.mxu0 0.0
    %1348 = vmatprep.subr.mxu0 0.0
    %1349 = vmatpush2.msra.mxu0 0.0
    %1350 = vmatprep.subr.mxu0 0.0
    %1351 = vmatpush2.msra.mxu0 0.0
    %1352 = vmatprep.subr.mxu0 0.0
    %1353 = vmatpush2.msra.mxu0 0.0
    %1354 = vmatprep.subr.mxu0 0.0
    %1355 = vmatpush2.msra.mxu0 0.0
    %1356 = vmatprep.subr.mxu0 0.0
    %1357 = vmatpush2.msra.mxu0 0.0
    %1358 = vmatprep.subr.mxu0 0.0
    %1359 = vmatpush2.msra.mxu0 0.0
    %1360 = vmatprep.subr.mxu0 0.0
    %1361 = vmatpush2.msra.mxu0 0.0
    %1362 = vmatprep.subr.mxu0 0.0
    %1363 = vmatpush2.msra.mxu0 0.0
    %1364 = vmatprep.mubr.f32.mxu0 0.0
    %1365 = vmatmul.mubr.f32.gmra.mxu0 %v1206
    %v1366 = vpop.f32.mrf.mxu0
    %v1367 = vadd.f32 0.0, %v1366
    %v1368 = vpop.f32.mrf.mxu0
    %1369 = vdwg.mxu0
    %v1370 = vadd.f32 %v1299, %v1367
    %v1371 = vtanh.pop %v1370
    %v1372 = vxor.u32 %v1370, 2147483648
    %v1373 = vmul.f32 %v1372, 1.442695
    %v1374 = vpow.pop %v1373
    %v1375 = vadd.f32 %v1374, 1.0
    %v1376 = vrcp.pop %v1375
    %v1377 = vmul.f32 1.0, %v1376
    %v1378 = vsel %vm62, %v1371, %v1377
    %1379 = vrot.lane.b32.xlu0 %v1378, 96
    %v1380 = vpop.permute.xlu0 %1379
    %1381 = vrot.lane.b32.xlu0 %v1378, 64
    %v1382 = vpop.permute.xlu0 %1381
    %1383 = vrot.lane.b32.xlu0 %v1378, 32
    %v1384 = vpop.permute.xlu0 %1383
    %v1385 = vmul.f32 %v1380, %v1204
    %v1386 = vmul.f32 %v1378, %v1382
    %v1387 = vadd.f32 %v1385, %v1386
    %v1388 = vtanh.pop %v1387
    %v1389 = vmul.f32 %v1384, %v1388
    %1390 = vrot.lane.b32.xlu0 %v1298, 32
    %v1391 = vpop.permute.xlu0 %1390
    %v1392 = vsel %vm63, %v1389, %v1391
    %1393 = vmatprep.subr.mxu0 0.0
    %1394 = vmatpush1.msra.mxu0 %v95
    %1395 = vmatprep.subr.mxu0 0.0
    %1396 = vmatpush1.msra.mxu0 %v94
    %1397 = vmatprep.subr.mxu0 0.0
    %1398 = vmatpush1.msra.mxu0 %v93
    %1399 = vmatprep.subr.mxu0 0.0
    %1400 = vmatpush1.msra.mxu0 %v92
    %1401 = vmatprep.subr.mxu0 0.0
    %1402 = vmatpush1.msra.mxu0 %v91
    %1403 = vmatprep.subr.mxu0 0.0
    %1404 = vmatpush1.msra.mxu0 %v90
    %1405 = vmatprep.subr.mxu0 0.0
    %1406 = vmatpush1.msra.mxu0 %v89
    %1407 = vmatprep.subr.mxu0 0.0
    %1408 = vmatpush1.msra.mxu0 %v88
    %1409 = vmatprep.subr.mxu0 0.0
    %1410 = vmatpush1.msra.mxu0 %v87
    %1411 = vmatprep.subr.mxu0 0.0
    %1412 = vmatpush1.msra.mxu0 %v86
    %1413 = vmatprep.subr.mxu0 0.0
    %1414 = vmatpush1.msra.mxu0 %v85
    %1415 = vmatprep.subr.mxu0 0.0
    %1416 = vmatpush1.msra.mxu0 %v84
    %1417 = vmatprep.subr.mxu0 0.0
    %1418 = vmatpush1.msra.mxu0 %v83
    %1419 = vmatprep.subr.mxu0 0.0
    %1420 = vmatpush1.msra.mxu0 %v82
    %1421 = vmatprep.subr.mxu0 0.0
    %1422 = vmatpush1.msra.mxu0 %v81
    %1423 = vmatprep.subr.mxu0 0.0
    %1424 = vmatpush1.msra.mxu0 %v80
    %1425 = vmatprep.subr.mxu0 0.0
    %1426 = vmatpush2.msra.mxu0 0.0
    %1427 = vmatprep.subr.mxu0 0.0
    %1428 = vmatpush2.msra.mxu0 0.0
    %1429 = vmatprep.subr.mxu0 0.0
    %1430 = vmatpush2.msra.mxu0 0.0
    %1431 = vmatprep.subr.mxu0 0.0
    %1432 = vmatpush2.msra.mxu0 0.0
    %1433 = vmatprep.subr.mxu0 0.0
    %1434 = vmatpush2.msra.mxu0 0.0
    %1435 = vmatprep.subr.mxu0 0.0
    %1436 = vmatpush2.msra.mxu0 0.0
    %1437 = vmatprep.subr.mxu0 0.0
    %1438 = vmatpush2.msra.mxu0 0.0
    %1439 = vmatprep.subr.mxu0 0.0
    %1440 = vmatpush2.msra.mxu0 0.0
    %1441 = vmatprep.subr.mxu0 0.0
    %1442 = vmatpush2.msra.mxu0 0.0
    %1443 = vmatprep.subr.mxu0 0.0
    %1444 = vmatpush2.msra.mxu0 0.0
    %1445 = vmatprep.subr.mxu0 0.0
    %1446 = vmatpush2.msra.mxu0 0.0
    %1447 = vmatprep.subr.mxu0 0.0
    %1448 = vmatpush2.msra.mxu0 0.0
    %1449 = vmatprep.subr.mxu0 0.0
    %1450 = vmatpush2.msra.mxu0 0.0
    %1451 = vmatprep.subr.mxu0 0.0
    %1452 = vmatpush2.msra.mxu0 0.0
    %1453 = vmatprep.subr.mxu0 0.0
    %1454 = vmatpush2.msra.mxu0 0.0
    %1455 = vmatprep.subr.mxu0 0.0
    %1456 = vmatpush2.msra.mxu0 0.0
    %1457 = vmatprep.mubr.f32.mxu0 0.0
    %1458 = vmatmul.mubr.f32.gmra.mxu0 %v1392
    %v1459 = vpop.f32.mrf.mxu0
    %v1460 = vadd.f32 %v101, %v1459
    %v1461 = vpop.f32.mrf.mxu0
    %1462 = vdwg.mxu0
    %v1463 = vtanh.pop %v1460
    %v1464 = vxor.u32 %v1460, 2147483648
    %v1465 = vmul.f32 %v1464, 1.442695
    %v1466 = vpow.pop %v1465
    %v1467 = vadd.f32 %v1466, 1.0
    %v1468 = vrcp.pop %v1467
    %v1469 = vmul.f32 1.0, %v1468
    %v1470 = vsel %vm62, %v1463, %v1469
    %1471 = vrot.lane.b32.xlu0 %v1470, 96
    %v1472 = vpop.permute.xlu0 %1471
    %1473 = vrot.lane.b32.xlu0 %v1470, 64
    %v1474 = vpop.permute.xlu0 %1473
    %1475 = vrot.lane.b32.xlu0 %v1470, 32
    %v1476 = vpop.permute.xlu0 %1475
    %v1477 = vmul.f32 %v1472, %v1296
    %v1478 = vmul.f32 %v1470, %v1474
    %v1479 = vadd.f32 %v1477, %v1478
    %v1480 = vtanh.pop %v1479
    %v1481 = vmul.f32 %v1476, %v1480
    %v1482 = vld [vmem:[#allocation2 + $0xe] sm:$0x3]
    %1483 = vmatprep.subr.mxu0 0.0
    %1484 = vmatpush1.msra.mxu0 %v79
    %1485 = vmatprep.subr.mxu0 0.0
    %1486 = vmatpush1.msra.mxu0 %v78
    %1487 = vmatprep.subr.mxu0 0.0
    %1488 = vmatpush1.msra.mxu0 %v77
    %1489 = vmatprep.subr.mxu0 0.0
    %1490 = vmatpush1.msra.mxu0 %v76
    %1491 = vmatprep.subr.mxu0 0.0
    %1492 = vmatpush1.msra.mxu0 %v75
    %1493 = vmatprep.subr.mxu0 0.0
    %1494 = vmatpush1.msra.mxu0 %v74
    %1495 = vmatprep.subr.mxu0 0.0
    %1496 = vmatpush1.msra.mxu0 %v73
    %1497 = vmatprep.subr.mxu0 0.0
    %1498 = vmatpush1.msra.mxu0 %v72
    %1499 = vmatprep.subr.mxu0 0.0
    %1500 = vmatpush1.msra.mxu0 %v71
    %1501 = vmatprep.subr.mxu0 0.0
    %1502 = vmatpush1.msra.mxu0 %v70
    %1503 = vmatprep.subr.mxu0 0.0
    %1504 = vmatpush1.msra.mxu0 %v69
    %1505 = vmatprep.subr.mxu0 0.0
    %1506 = vmatpush1.msra.mxu0 %v68
    %1507 = vmatprep.subr.mxu0 0.0
    %1508 = vmatpush1.msra.mxu0 %v67
    %1509 = vmatprep.subr.mxu0 0.0
    %1510 = vmatpush1.msra.mxu0 %v66
    %1511 = vmatprep.subr.mxu0 0.0
    %1512 = vmatpush1.msra.mxu0 %v65
    %1513 = vmatprep.subr.mxu0 0.0
    %1514 = vmatpush1.msra.mxu0 %v64
    %1515 = vmatprep.subr.mxu0 0.0
    %1516 = vmatpush2.msra.mxu0 0.0
    %1517 = vmatprep.subr.mxu0 0.0
    %1518 = vmatpush2.msra.mxu0 0.0
    %1519 = vmatprep.subr.mxu0 0.0
    %1520 = vmatpush2.msra.mxu0 0.0
    %1521 = vmatprep.subr.mxu0 0.0
    %1522 = vmatpush2.msra.mxu0 0.0
    %1523 = vmatprep.subr.mxu0 0.0
    %1524 = vmatpush2.msra.mxu0 0.0
    %1525 = vmatprep.subr.mxu0 0.0
    %1526 = vmatpush2.msra.mxu0 0.0
    %1527 = vmatprep.subr.mxu0 0.0
    %1528 = vmatpush2.msra.mxu0 0.0
    %1529 = vmatprep.subr.mxu0 0.0
    %1530 = vmatpush2.msra.mxu0 0.0
    %1531 = vmatprep.subr.mxu0 0.0
    %1532 = vmatpush2.msra.mxu0 0.0
    %1533 = vmatprep.subr.mxu0 0.0
    %1534 = vmatpush2.msra.mxu0 0.0
    %1535 = vmatprep.subr.mxu0 0.0
    %1536 = vmatpush2.msra.mxu0 0.0
    %1537 = vmatprep.subr.mxu0 0.0
    %1538 = vmatpush2.msra.mxu0 0.0
    %1539 = vmatprep.subr.mxu0 0.0
    %1540 = vmatpush2.msra.mxu0 0.0
    %1541 = vmatprep.subr.mxu0 0.0
    %1542 = vmatpush2.msra.mxu0 0.0
    %1543 = vmatprep.subr.mxu0 0.0
    %1544 = vmatpush2.msra.mxu0 0.0
    %1545 = vmatprep.subr.mxu0 0.0
    %1546 = vmatpush2.msra.mxu0 0.0
    %1547 = vmatprep.mubr.f32.mxu0 0.0
    %1548 = vmatmul.mubr.f32.gmra.mxu0 %v1389
    %v1549 = vpop.f32.mrf.mxu0
    %v1550 = vadd.f32 0.0, %v1549
    %v1551 = vpop.f32.mrf.mxu0
    %1552 = vdwg.mxu0
    %v1553 = vadd.f32 %v1482, %v1550
    %v1554 = vtanh.pop %v1553
    %v1555 = vxor.u32 %v1553, 2147483648
    %v1556 = vmul.f32 %v1555, 1.442695
    %v1557 = vpow.pop %v1556
    %v1558 = vadd.f32 %v1557, 1.0
    %v1559 = vrcp.pop %v1558
    %v1560 = vmul.f32 1.0, %v1559
    %v1561 = vsel %vm62, %v1554, %v1560
    %1562 = vrot.lane.b32.xlu0 %v1561, 96
    %v1563 = vpop.permute.xlu0 %1562
    %1564 = vrot.lane.b32.xlu0 %v1561, 64
    %v1565 = vpop.permute.xlu0 %1564
    %1566 = vrot.lane.b32.xlu0 %v1561, 32
    %v1567 = vpop.permute.xlu0 %1566
    %v1568 = vmul.f32 %v1563, %v1387
    %v1569 = vmul.f32 %v1561, %v1565
    %v1570 = vadd.f32 %v1568, %v1569
    %v1571 = vtanh.pop %v1570
    %v1572 = vmul.f32 %v1567, %v1571
    %1573 = vrot.lane.b32.xlu0 %v1481, 32
    %v1574 = vpop.permute.xlu0 %1573
    %v1575 = vsel %vm63, %v1572, %v1574
    %1576 = vmatprep.subr.mxu0 0.0
    %1577 = vmatpush1.msra.mxu0 %v95
    %1578 = vmatprep.subr.mxu0 0.0
    %1579 = vmatpush1.msra.mxu0 %v94
    %1580 = vmatprep.subr.mxu0 0.0
    %1581 = vmatpush1.msra.mxu0 %v93
    %1582 = vmatprep.subr.mxu0 0.0
    %1583 = vmatpush1.msra.mxu0 %v92
    %1584 = vmatprep.subr.mxu0 0.0
    %1585 = vmatpush1.msra.mxu0 %v91
    %1586 = vmatprep.subr.mxu0 0.0
    %1587 = vmatpush1.msra.mxu0 %v90
    %1588 = vmatprep.subr.mxu0 0.0
    %1589 = vmatpush1.msra.mxu0 %v89
    %1590 = vmatprep.subr.mxu0 0.0
    %1591 = vmatpush1.msra.mxu0 %v88
    %1592 = vmatprep.subr.mxu0 0.0
    %1593 = vmatpush1.msra.mxu0 %v87
    %1594 = vmatprep.subr.mxu0 0.0
    %1595 = vmatpush1.msra.mxu0 %v86
    %1596 = vmatprep.subr.mxu0 0.0
    %1597 = vmatpush1.msra.mxu0 %v85
    %1598 = vmatprep.subr.mxu0 0.0
    %1599 = vmatpush1.msra.mxu0 %v84
    %1600 = vmatprep.subr.mxu0 0.0
    %1601 = vmatpush1.msra.mxu0 %v83
    %1602 = vmatprep.subr.mxu0 0.0
    %1603 = vmatpush1.msra.mxu0 %v82
    %1604 = vmatprep.subr.mxu0 0.0
    %1605 = vmatpush1.msra.mxu0 %v81
    %1606 = vmatprep.subr.mxu0 0.0
    %1607 = vmatpush1.msra.mxu0 %v80
    %1608 = vmatprep.subr.mxu0 0.0
    %1609 = vmatpush2.msra.mxu0 0.0
    %1610 = vmatprep.subr.mxu0 0.0
    %1611 = vmatpush2.msra.mxu0 0.0
    %1612 = vmatprep.subr.mxu0 0.0
    %1613 = vmatpush2.msra.mxu0 0.0
    %1614 = vmatprep.subr.mxu0 0.0
    %1615 = vmatpush2.msra.mxu0 0.0
    %1616 = vmatprep.subr.mxu0 0.0
    %1617 = vmatpush2.msra.mxu0 0.0
    %1618 = vmatprep.subr.mxu0 0.0
    %1619 = vmatpush2.msra.mxu0 0.0
    %1620 = vmatprep.subr.mxu0 0.0
    %1621 = vmatpush2.msra.mxu0 0.0
    %1622 = vmatprep.subr.mxu0 0.0
    %1623 = vmatpush2.msra.mxu0 0.0
    %1624 = vmatprep.subr.mxu0 0.0
    %1625 = vmatpush2.msra.mxu0 0.0
    %1626 = vmatprep.subr.mxu0 0.0
    %1627 = vmatpush2.msra.mxu0 0.0
    %1628 = vmatprep.subr.mxu0 0.0
    %1629 = vmatpush2.msra.mxu0 0.0
    %1630 = vmatprep.subr.mxu0 0.0
    %1631 = vmatpush2.msra.mxu0 0.0
    %1632 = vmatprep.subr.mxu0 0.0
    %1633 = vmatpush2.msra.mxu0 0.0
    %1634 = vmatprep.subr.mxu0 0.0
    %1635 = vmatpush2.msra.mxu0 0.0
    %1636 = vmatprep.subr.mxu0 0.0
    %1637 = vmatpush2.msra.mxu0 0.0
    %1638 = vmatprep.subr.mxu0 0.0
    %1639 = vmatpush2.msra.mxu0 0.0
    %1640 = vmatprep.mubr.f32.mxu0 0.0
    %1641 = vmatmul.mubr.f32.gmra.mxu0 %v1575
    %v1642 = vpop.f32.mrf.mxu0
    %v1643 = vadd.f32 %v101, %v1642
    %v1644 = vpop.f32.mrf.mxu0
    %1645 = vdwg.mxu0
    %v1646 = vtanh.pop %v1643
    %v1647 = vxor.u32 %v1643, 2147483648
    %v1648 = vmul.f32 %v1647, 1.442695
    %v1649 = vpow.pop %v1648
    %v1650 = vadd.f32 %v1649, 1.0
    %v1651 = vrcp.pop %v1650
    %v1652 = vmul.f32 1.0, %v1651
    %v1653 = vsel %vm62, %v1646, %v1652
    %1654 = vrot.lane.b32.xlu0 %v1653, 96
    %v1655 = vpop.permute.xlu0 %1654
    %1656 = vrot.lane.b32.xlu0 %v1653, 64
    %v1657 = vpop.permute.xlu0 %1656
    %1658 = vrot.lane.b32.xlu0 %v1653, 32
    %v1659 = vpop.permute.xlu0 %1658
    %v1660 = vmul.f32 %v1655, %v1479
    %v1661 = vmul.f32 %v1653, %v1657
    %v1662 = vadd.f32 %v1660, %v1661
    %v1663 = vtanh.pop %v1662
    %v1664 = vmul.f32 %v1659, %v1663
    %v1665 = vld [vmem:[%s6] sm:$0x1]
    %v1667 = vlaneseq
    %v1668 = vshrl.u32 %v1667, 7
    %v1669 = vsub.s32 0, %v1668
    %v1670 = vrot.slane %v1665, %v1669
    %v1672 = vmul.f32 %v1664, %v1670
    %vm1673 = vcmask 1041408
    %v1674 = vsel %vm1673, %v1672, 0.0
    %1675 = vadd.xlane.f32.xlu0 %v1674
    %v1676 = vpop.xlane.xlu0 %1675
    %s1677 = sld [smem:[#allocation3]]
    %v1678 = vstv %s1677
    %v1679 = vadd.f32 %v1676, %v1678
    %vm1680 = vcmask 1024
    %1681 = vst.msk [vmem:[%s8] sm:$0x3] %vm1680, %v1679
    // Predicated region
    $region42: #{tpu_custom_call.1} parent=1 // pred_check
      _
    $region43: #{tpu_custom_call.1} parent=1 // pred_check_branch
      %1683 = sbr.rel (0) target = $region45
    $region44: #{tpu_custom_call.1} parent=1 // pred_region
      _
    $region45: #{tpu_custom_call.1} parent=1 // pred_fallthru
      _
    // Predicated region
    $region46: #{tpu_custom_call.1} parent=1 // pred_check
      _
    $region47: #{tpu_custom_call.1} parent=1 // pred_check_branch
      %1685 = sbr.rel (0) target = $region49
    $region48: #{tpu_custom_call.1} parent=1 // pred_region
      _
    $region49: #{tpu_custom_call.1} parent=1 // pred_fallthru
      _
    %1686 = vsyncpa [#allocation5], 1
    %1687 = vsyncpa [#allocation7], 1

</llo_original>
